<compile_context>
chip_gen: v7x
topology: tpu7x:2x2x1
jax: 0.10.0
libtpu: 0.0.40
codegen_flags: <defaults>
</compile_context>

<pallas_src>
import numpy as np
import jax
import jax.numpy as jnp
from jax.experimental import pallas as pl
from jax.experimental.pallas import tpu as pltpu

NUM_DOMAINS = 2
BN_EPS = 1e-5


def _choose_tn(n):
    """Largest point tile (multiple of 128) that still leaves >=2 grid points
    (v7x has 2 TensorCores; a 1-point parallel grid leaves half the chip idle)."""
    for tn in (512, 256, 128):
        if n >= 2 * tn:
            return tn
    return 128


# ---------------------------------------------------------------------------
# Pallas kernels: one deep matmul per point tile + fused BN affine / ReLU
# ---------------------------------------------------------------------------
def _conv_bn_relu_kernel(g_ref, w_ref, scale_ref, shift_ref, o_ref):
    """out = relu(bn(g @ W)) for one tile of points.  g/W are bf16, acc is f32."""
    acc = jnp.dot(g_ref[...], w_ref[...], preferred_element_type=jnp.float32)
    y = acc * scale_ref[...] + shift_ref[...]
    o_ref[...] = jnp.maximum(y, 0.0).astype(o_ref.dtype)


def _conv_bn_add_relu_kernel(g_ref, w_ref, scale_ref, shift_ref, res_ref, o_ref):
    """out = relu(bn(g @ W) + residual) for one tile of points."""
    acc = jnp.dot(g_ref[...], w_ref[...], preferred_element_type=jnp.float32)
    y = acc * scale_ref[...] + shift_ref[...] + res_ref[...]
    o_ref[...] = jnp.maximum(y, 0.0).astype(o_ref.dtype)


def _conv_bn_act(g, w_flat, scale, shift, residual=None):
    """g: (N, K*Cin) bf16, w_flat: (K*Cin, Cout) bf16, scale/shift: (1, Cout) f32,
    residual: optional (N, Cout) f32.  Returns (N, Cout) f32."""
    n, kc = g.shape
    cout = w_flat.shape[1]
    tn = _choose_tn(n)
    n_pad = -(-n // tn) * tn
    pad = n_pad - n
    if pad:  # pad so no trailing points are silently dropped
        g = jnp.pad(g, ((0, pad), (0, 0)))
        if residual is not None:
            residual = jnp.pad(residual, ((0, pad), (0, 0)))

    grid = (n_pad // tn,)
    g_spec = pl.BlockSpec((tn, kc), lambda i: (i, 0))
    w_spec = pl.BlockSpec((kc, cout), lambda i: (0, 0))       # whole weight resident in VMEM
    vec_spec = pl.BlockSpec((1, cout), lambda i: (0, 0))      # BN affine resident in VMEM
    tile_spec = pl.BlockSpec((tn, cout), lambda i: (i, 0))

    if residual is None:
        kernel = _conv_bn_relu_kernel
        in_specs = [g_spec, w_spec, vec_spec, vec_spec]
        args = (g, w_flat, scale, shift)
    else:
        kernel = _conv_bn_add_relu_kernel
        in_specs = [g_spec, w_spec, vec_spec, vec_spec, tile_spec]
        args = (g, w_flat, scale, shift, residual)

    out = pl.pallas_call(
        kernel,
        out_shape=jax.ShapeDtypeStruct((n_pad, cout), jnp.float32),
        grid_spec=pltpu.PrefetchScalarGridSpec(
            num_scalar_prefetch=0,
            grid=grid,
            in_specs=in_specs,
            out_specs=tile_spec,
        ),
        compiler_params=pltpu.CompilerParams(
            dimension_semantics=("parallel",)),
    )(*args)
    return out[:n] if pad else out


# ---------------------------------------------------------------------------
# Glue: sparse kernel map, folded neighbor gather, BN param selection
# ---------------------------------------------------------------------------
def build_kernel_map(coords, grid_size, dilation=1):
    """coords: (N, 3) int numpy voxel coords.  Returns (K, N) int32 neighbor index
    map for a kernel_size=3, stride=1 Minkowski conv (-1 where neighbor absent)."""
    coords = np.asarray(coords)
    N = coords.shape[0]
    lookup = -np.ones((grid_size,) * 3, dtype=np.int32)
    lookup[coords[:, 0], coords[:, 1], coords[:, 2]] = np.arange(N, dtype=np.int32)

    offsets = []
    for dx in (-1, 0, 1):
        for dy in (-1, 0, 1):
            for dz in (-1, 0, 1):
                offsets.append((dx * dilation, dy * dilation, dz * dilation))
    offsets = np.asarray(offsets, dtype=np.int32)            # (27, 3)

    K = offsets.shape[0]
    idx = -np.ones((K, N), dtype=np.int32)
    for k in range(K):
        nc = coords + offsets[k]
        valid = np.all((nc >= 0) & (nc < grid_size), axis=1)
        vi = np.where(valid)[0]
        idx[k, vi] = lookup[nc[vi, 0], nc[vi, 1], nc[vi, 2]]
    return jnp.asarray(idx)


def gather_neighbors_folded(x, idx):
    """x: (N, C), idx: (K, N) -> (N, K*C) bfloat16, zero-filled where idx == -1.
    The K axis is folded next to C so the conv reduces to one deep matmul."""
    # TODO(synk): in-kernel gather (scalar-prefetched idx + VMEM-resident features) would
    # avoid materializing this (N, K*C) tensor in HBM, but a dynamically-indexed row
    # gather from a VMEM ref has no robust Mosaic lowering; gather stays in XLA (bf16
    # halves its HBM traffic).
    idx_t = idx.T                                            # (N, K)
    xb = x.astype(jnp.bfloat16)
    g = xb[jnp.maximum(idx_t, 0)]                            # (N, K, C)
    g = jnp.where((idx_t >= 0)[..., None], g, jnp.zeros_like(g))
    return g.reshape(x.shape[0], -1)                         # (N, K*C)


def bn_affine(bn, domain_label):
    """Inference-mode domain BatchNorm folded to a per-channel affine (f32)."""
    gamma = bn["gamma"][domain_label]
    beta = bn["beta"][domain_label]
    mean = bn["mean"][domain_label]
    var = bn["var"][domain_label]
    scale = gamma * jax.lax.rsqrt(var + BN_EPS)
    shift = beta - mean * scale
    return scale, shift


def init_params(key, inplanes, planes, K=27):
    ks = jax.random.split(key, 10)
    fan1 = K * inplanes
    fan2 = K * planes
    w1 = jax.random.normal(ks[0], (K, inplanes, planes), jnp.float32) / np.sqrt(fan1)
    w2 = jax.random.normal(ks[1], (K, planes, planes), jnp.float32) / np.sqrt(fan2)

    def bn_init(kg, kb, km, kv, c):
        return dict(
            gamma=1.0 + 0.1 * jax.random.normal(kg, (NUM_DOMAINS, c), jnp.float32),
            beta=0.1 * jax.random.normal(kb, (NUM_DOMAINS, c), jnp.float32),
            mean=0.1 * jax.random.normal(km, (NUM_DOMAINS, c), jnp.float32),
            var=1.0 + 0.1 * jax.random.uniform(kv, (NUM_DOMAINS, c), jnp.float32),
        )

    return dict(
        w1=w1,
        w2=w2,
        bn1=bn_init(ks[2], ks[3], ks[4], ks[5], planes),
        bn2=bn_init(ks[6], ks[7], ks[8], ks[9], planes),
    )


def domain_basic_block_forward(x, domain_label, idx_map, params):
    """Pallas-backed forward of DomainBasicBlock (stride=1, downsample=None)."""
    residual = x                                             # downsample is None
    cout1 = params["w1"].shape[-1]
    cout2 = params["w2"].shape[-1]

    s1, b1 = bn_affine(params["bn1"], domain_label)
    g1 = gather_neighbors_folded(x, idx_map)                 # (N, K*Cin) bf16
    w1 = params["w1"].reshape(-1, cout1).astype(jnp.bfloat16)
    out = _conv_bn_act(g1, w1, s1.reshape(1, -1), b1.reshape(1, -1))   # conv1->bn1->relu

    s2, b2 = bn_affine(params["bn2"], domain_label)
    g2 = gather_neighbors_folded(out, idx_map)               # (N, K*planes) bf16
    w2 = params["w2"].reshape(-1, cout2).astype(jnp.bfloat16)
    out = _conv_bn_act(g2, w2, s2.reshape(1, -1), b2.reshape(1, -1),
                       residual=residual)                    # conv2->bn2->+res->relu
    return out
    # TODO(synk): downsample branch (strided MinkowskiConvolution producing a new
    # coordinate set) not instantiated here (module built with downsample=None).


def reference_forward(x, domain_label, idx_map, params):
    """Pure-JAX reference using the same bf16 matmul-input quantization / f32 accum."""
    def conv(feat, w):
        g = gather_neighbors_folded(feat, idx_map).astype(jnp.float32)
        wf = w.reshape(-1, w.shape[-1]).astype(jnp.bfloat16).astype(jnp.float32)
        return g @ wf

    def bn(feat, p):
        s, b = bn_affine(p, domain_label)
        return feat * s + b

    out = jax.nn.relu(bn(conv(x, params["w1"]), params["bn1"]))
    out = bn(conv(out, params["w2"]), params["bn2"]) + x
    return jax.nn.relu(out)


# ---------------------------------------------------------------------------
if __name__ == "__main__":
    key = jax.random.PRNGKey(0)
    k_pts, k_feat, k_par = jax.random.split(key, 3)

    GRID = 8           # 8^3 voxel grid
    N = 300            # active voxels (deliberately NOT a multiple of 128: exercises padding)
    INPLANES = 32
    PLANES = 32        # == INPLANES since downsample is None
    DOMAIN_LABEL = 1

    # deterministic sparse coordinate set
    flat = jax.random.permutation(k_pts, GRID ** 3)[:N]
    coords = np.stack(np.unravel_index(np.asarray(flat), (GRID, GRID, GRID)), axis=1)

    idx_map = build_kernel_map(coords, GRID, dilation=1)            # (27, N)
    x = jax.random.normal(k_feat, (N, INPLANES), jnp.float32)       # sparse features
    params = init_params(k_par, INPLANES, PLANES, K=27)

    fwd = jax.jit(domain_basic_block_forward)
    out = jax.block_until_ready(fwd(x, DOMAIN_LABEL, idx_map, params))

    ref = jax.block_until_ready(reference_forward(x, DOMAIN_LABEL, idx_map, params))
    np.testing.assert_allclose(np.asarray(out), np.asarray(ref), rtol=2e-3, atol=2e-3)

    print("KERNEL_OK")
</pallas_src>

<mosaic_0001>
module attributes {stable_mosaic.version = 11 : i64} {
  func.func @_conv_bn_relu_kernel(%arg0: i32, %arg1: memref<128x864xbf16, #tpu.memory_space<vmem>>, %arg2: memref<864x32xbf16, #tpu.memory_space<vmem>>, %arg3: memref<1x32xf32, #tpu.memory_space<vmem>>, %arg4: memref<1x32xf32, #tpu.memory_space<vmem>>, %arg5: memref<128x32xf32, #tpu.memory_space<vmem>>) attributes {dimension_semantics = [#tpu.dimension_semantics<parallel>], iteration_bounds = array<i64: 3>, scalar_prefetch = 0 : i64, scratch_operands = 0 : i64, tpu.core_type = #tpu.core_type<tc>, window_params = [{transform_indices = @transform_0, window_bounds = array<i64: 128, 864>}, {pipeline_mode = #tpu.pipeline_mode<synchronous>, transform_indices = @transform_1, window_bounds = array<i64: 864, 32>}, {pipeline_mode = #tpu.pipeline_mode<synchronous>, transform_indices = @transform_2, window_bounds = array<i64: 1, 32>}, {pipeline_mode = #tpu.pipeline_mode<synchronous>, transform_indices = @transform_3, window_bounds = array<i64: 1, 32>}, {transform_indices = @transform_4, window_bounds = array<i64: 128, 32>}]} {
    %c0 = arith.constant 0 : index
    %c0_0 = arith.constant 0 : index
    %0 = vector.load %arg1[%c0, %c0_0] : memref<128x864xbf16, #tpu.memory_space<vmem>>, vector<128x864xbf16>
    %c0_1 = arith.constant 0 : index
    %c0_2 = arith.constant 0 : index
    %1 = vector.load %arg2[%c0_1, %c0_2] : memref<864x32xbf16, #tpu.memory_space<vmem>>, vector<864x32xbf16>
    %cst = arith.constant dense<0.000000e+00> : vector<128x32xf32>
    %2 = tpu.matmul %0, %1, %cst {dimension_numbers = #tpu.dot_dimension_numbers<[1], [0], [0], [1], [0, 0, 1, 1], [], []>} : vector<128x864xbf16>, vector<864x32xbf16>, vector<128x32xf32> -> vector<128x32xf32>
    %c0_3 = arith.constant 0 : index
    %c0_4 = arith.constant 0 : index
    %3 = vector.load %arg3[%c0_3, %c0_4] : memref<1x32xf32, #tpu.memory_space<vmem>>, vector<1x32xf32>
    %4 = vector.broadcast %3 : vector<1x32xf32> to vector<128x32xf32>
    %5 = arith.mulf %2, %4 : vector<128x32xf32>
    %c0_5 = arith.constant 0 : index
    %c0_6 = arith.constant 0 : index
    %6 = vector.load %arg4[%c0_5, %c0_6] : memref<1x32xf32, #tpu.memory_space<vmem>>, vector<1x32xf32>
    %7 = vector.broadcast %6 : vector<1x32xf32> to vector<128x32xf32>
    %8 = arith.addf %5, %7 : vector<128x32xf32>
    %cst_7 = arith.constant 0.000000e+00 : f32
    %9 = vector.broadcast %cst_7 : f32 to vector<128x32xf32>
    %10 = arith.maximumf %8, %9 : vector<128x32xf32>
    %c0_8 = arith.constant 0 : index
    %c0_9 = arith.constant 0 : index
    %11 = vector.load %arg5[%c0_8, %c0_9] : memref<128x32xf32, #tpu.memory_space<vmem>>, vector<128x32xf32>
    tpu.vector_store %arg5[%c0_8, %c0_9], %10 {strides = array<i32>} : memref<128x32xf32, #tpu.memory_space<vmem>>, vector<128x32xf32>,
    return
  }
  func.func @transform_0(%arg0: i32) -> (i32, i32) {
    %c0_i32 = arith.constant 0 : i32
    %c0_i32_0 = arith.constant 0 : i32
    return %arg0, %c0_i32 : i32, i32
  }
  func.func @transform_1(%arg0: i32) -> (i32, i32) {
    %c0_i32 = arith.constant 0 : i32
    %c0_i32_0 = arith.constant 0 : i32
    %c0_i32_1 = arith.constant 0 : i32
    return %c0_i32, %c0_i32_0 : i32, i32
  }
  func.func @transform_2(%arg0: i32) -> (i32, i32) {
    %c0_i32 = arith.constant 0 : i32
    %c0_i32_0 = arith.constant 0 : i32
    %c0_i32_1 = arith.constant 0 : i32
    return %c0_i32, %c0_i32_0 : i32, i32
  }
  func.func @transform_3(%arg0: i32) -> (i32, i32) {
    %c0_i32 = arith.constant 0 : i32
    %c0_i32_0 = arith.constant 0 : i32
    %c0_i32_1 = arith.constant 0 : i32
    return %c0_i32, %c0_i32_0 : i32, i32
  }
  func.func @transform_4(%arg0: i32) -> (i32, i32) {
    %c0_i32 = arith.constant 0 : i32
    %c0_i32_0 = arith.constant 0 : i32
    return %arg0, %c0_i32 : i32, i32
  }
}

module attributes {stable_mosaic.version = 11 : i64} {
  func.func @_conv_bn_add_relu_kernel(%arg0: i32, %arg1: memref<128x864xbf16, #tpu.memory_space<vmem>>, %arg2: memref<864x32xbf16, #tpu.memory_space<vmem>>, %arg3: memref<1x32xf32, #tpu.memory_space<vmem>>, %arg4: memref<1x32xf32, #tpu.memory_space<vmem>>, %arg5: memref<128x32xf32, #tpu.memory_space<vmem>>, %arg6: memref<128x32xf32, #tpu.memory_space<vmem>>) attributes {dimension_semantics = [#tpu.dimension_semantics<parallel>], iteration_bounds = array<i64: 3>, scalar_prefetch = 0 : i64, scratch_operands = 0 : i64, tpu.core_type = #tpu.core_type<tc>, window_params = [{transform_indices = @transform_0, window_bounds = array<i64: 128, 864>}, {pipeline_mode = #tpu.pipeline_mode<synchronous>, transform_indices = @transform_1, window_bounds = array<i64: 864, 32>}, {pipeline_mode = #tpu.pipeline_mode<synchronous>, transform_indices = @transform_2, window_bounds = array<i64: 1, 32>}, {pipeline_mode = #tpu.pipeline_mode<synchronous>, transform_indices = @transform_3, window_bounds = array<i64: 1, 32>}, {transform_indices = @transform_4, window_bounds = array<i64: 128, 32>}, {transform_indices = @transform_5, window_bounds = array<i64: 128, 32>}]} {
    %c0 = arith.constant 0 : index
    %c0_0 = arith.constant 0 : index
    %0 = vector.load %arg1[%c0, %c0_0] : memref<128x864xbf16, #tpu.memory_space<vmem>>, vector<128x864xbf16>
    %c0_1 = arith.constant 0 : index
    %c0_2 = arith.constant 0 : index
    %1 = vector.load %arg2[%c0_1, %c0_2] : memref<864x32xbf16, #tpu.memory_space<vmem>>, vector<864x32xbf16>
    %cst = arith.constant dense<0.000000e+00> : vector<128x32xf32>
    %2 = tpu.matmul %0, %1, %cst {dimension_numbers = #tpu.dot_dimension_numbers<[1], [0], [0], [1], [0, 0, 1, 1], [], []>} : vector<128x864xbf16>, vector<864x32xbf16>, vector<128x32xf32> -> vector<128x32xf32>
    %c0_3 = arith.constant 0 : index
    %c0_4 = arith.constant 0 : index
    %3 = vector.load %arg3[%c0_3, %c0_4] : memref<1x32xf32, #tpu.memory_space<vmem>>, vector<1x32xf32>
    %4 = vector.broadcast %3 : vector<1x32xf32> to vector<128x32xf32>
    %5 = arith.mulf %2, %4 : vector<128x32xf32>
    %c0_5 = arith.constant 0 : index
    %c0_6 = arith.constant 0 : index
    %6 = vector.load %arg4[%c0_5, %c0_6] : memref<1x32xf32, #tpu.memory_space<vmem>>, vector<1x32xf32>
    %7 = vector.broadcast %6 : vector<1x32xf32> to vector<128x32xf32>
    %8 = arith.addf %5, %7 : vector<128x32xf32>
    %c0_7 = arith.constant 0 : index
    %c0_8 = arith.constant 0 : index
    %9 = vector.load %arg5[%c0_7, %c0_8] : memref<128x32xf32, #tpu.memory_space<vmem>>, vector<128x32xf32>
    %10 = arith.addf %8, %9 : vector<128x32xf32>
    %cst_9 = arith.constant 0.000000e+00 : f32
    %11 = vector.broadcast %cst_9 : f32 to vector<128x32xf32>
    %12 = arith.maximumf %10, %11 : vector<128x32xf32>
    %c0_10 = arith.constant 0 : index
    %c0_11 = arith.constant 0 : index
    %13 = vector.load %arg6[%c0_10, %c0_11] : memref<128x32xf32, #tpu.memory_space<vmem>>, vector<128x32xf32>
    tpu.vector_store %arg6[%c0_10, %c0_11], %12 {strides = array<i32>} : memref<128x32xf32, #tpu.memory_space<vmem>>, vector<128x32xf32>,
    return
  }
  func.func @transform_0(%arg0: i32) -> (i32, i32) {
    %c0_i32 = arith.constant 0 : i32
    %c0_i32_0 = arith.constant 0 : i32
    return %arg0, %c0_i32 : i32, i32
  }
  func.func @transform_1(%arg0: i32) -> (i32, i32) {
    %c0_i32 = arith.constant 0 : i32
    %c0_i32_0 = arith.constant 0 : i32
    %c0_i32_1 = arith.constant 0 : i32
    return %c0_i32, %c0_i32_0 : i32, i32
  }
  func.func @transform_2(%arg0: i32) -> (i32, i32) {
    %c0_i32 = arith.constant 0 : i32
    %c0_i32_0 = arith.constant 0 : i32
    %c0_i32_1 = arith.constant 0 : i32
    return %c0_i32, %c0_i32_0 : i32, i32
  }
  func.func @transform_3(%arg0: i32) -> (i32, i32) {
    %c0_i32 = arith.constant 0 : i32
    %c0_i32_0 = arith.constant 0 : i32
    %c0_i32_1 = arith.constant 0 : i32
    return %c0_i32, %c0_i32_0 : i32, i32
  }
  func.func @transform_4(%arg0: i32) -> (i32, i32) {
    %c0_i32 = arith.constant 0 : i32
    %c0_i32_0 = arith.constant 0 : i32
    return %arg0, %c0_i32 : i32, i32
  }
  func.func @transform_5(%arg0: i32) -> (i32, i32) {
    %c0_i32 = arith.constant 0 : i32
    %c0_i32_0 = arith.constant 0 : i32
    return %arg0, %c0_i32 : i32, i32
  }
}

</mosaic_0001>

<llo_original>
// kernel: domain_basic_block_forward.3
$region0: #{domain_basic_block_forward.3}
  #allocation0 [shape = 'u32[]', space=smem, size = 0x4, offset = 0x4, fixed_abs, tag = 'smem constant byte address 0x4 - core index']
  #allocation1 [shape = 'u32[144,128]{1,0:T(1,128)}', space=vmem, size = 0x12000, scoped, tag = 'internal scratch']
  %s0 = inlined_call_operand.vmem [shape: bf16[384,864], index: 0, kind: input, shape index: {}]
  %s1 = inlined_call_operand.vmem [shape: bf16[864,32], index: 1, kind: input, shape index: {}]
  %s2 = inlined_call_operand.vmem [shape: f32[1,32], index: 2, kind: input, shape index: {}]
  %s3 = inlined_call_operand.vmem [shape: f32[1,32], index: 3, kind: input, shape index: {}]
  %s4 = inlined_call_operand.vmem [shape: f32[384,32], index: 4, kind: input, shape index: {}]
  %s5 = inlined_call_operand.vmem [shape: f32[384,32], index: 5, kind: output, shape index: {}]
  %s6 = sld [smem:[#allocation0]]
  $region53: #{domain_basic_block_forward.3} parent=0
    _
  %s8 = ssub.s32 1, %s6
  %s9 = scalar_select 0, %s8, %s6
  loop: start=0, step=1, limit=5
  $region2: #{domain_basic_block_forward.3} parent=0 // loop_pre_header
    _
  $region3: #{domain_basic_block_forward.3} parent=0 // loop_header
    %s11 = sphi 0, %s15
    %p12 = scmp.ge.s32.totalorder %s11, 5
    %s21 = sphi 0, %s23
    %s24 = sphi 0, %s21
    %s25 = sphi 0, %s24
    %s41 = sphi 0, %s25
    %s45 = sphi 0, %s45
    %s47 = sphi 0, %s45
    %s48 = sphi 0, %s47
    %s62 = sphi 0, %s48
    %s66 = sphi 0, %s66
    %s68 = sphi 0, %s66
    %s69 = sphi 0, %s68
    %s83 = sphi 0, %s69
    %s87 = sphi 0, %s87
    %s89 = sphi 0, %s87
    %s90 = sphi 0, %s89
    %s104 = sphi 0, %s90
    %s110 = sphi 0, %s112
    %s113 = sphi 0, %s110
    %s114 = sphi 0, %s113
    %s130 = sphi 0, %s114
    %s136 = sphi 0, %s138
    %s139 = sphi 0, %s136
    %s140 = sphi 0, %s139
    %s156 = sphi 0, %s140
  $region4: #{domain_basic_block_forward.3} parent=0 // loop_header_branch
    %14 = sbr.rel (%p12) target = $region8
  $region5: #{domain_basic_block_forward.3} parent=0 // loop_body
    %s16 = ssub.s32 %s11, 1
    %s17 = ssub.s32 %s11, 2
    %s18 = sadd.s32 %s11, 1
    %s19 = ssub.s32 %s11, %s18
    %p20 = scmp.eq.s32.totalorder %s19, 0
    %s22 = sadd.s32 %s21, 1
    %s23 = scalar_select %p20, %s21, %s22
    %p26 = pneg %p20
    %p27 = scmp.eq.s32.totalorder %s11, 2
    %p28 = por %p26, %p27
    %p29 = scmp.ne.s32.totalorder %s21, %s24
    %p30 = scmp.eq.s32.totalorder %s11, 0
    %p31 = por %p29, %p30
    %p32 = scmp.ne.s32.totalorder %s21, %s24
    %p33 = scmp.eq.s32.totalorder %s16, 2
    %p34 = por %p32, %p33
    %p35 = scmp.ne.s32.totalorder %s24, %s25
    %p36 = scmp.eq.s32.totalorder %s16, 0
    %p37 = por %p35, %p36
    %p38 = scmp.ne.s32.totalorder %s24, %s25
    %p39 = scmp.eq.s32.totalorder %s17, 2
    %p40 = por %p38, %p39
    %p42 = scmp.ne.s32.totalorder %s25, %s41
    %p43 = scmp.eq.s32.totalorder %s17, 0
    %p44 = por %p42, %p43
    %s46 = sadd.s32 %s45, 1
    %p49 = scmp.eq.s32.totalorder %s11, 2
    %p50 = scmp.ne.s32.totalorder %s45, %s47
    %p51 = scmp.eq.s32.totalorder %s11, 0
    %p52 = por %p50, %p51
    %p53 = scmp.ne.s32.totalorder %s45, %s47
    %p54 = scmp.eq.s32.totalorder %s16, 2
    %p55 = por %p53, %p54
    %p56 = scmp.ne.s32.totalorder %s47, %s48
    %p57 = scmp.eq.s32.totalorder %s16, 0
    %p58 = por %p56, %p57
    %p59 = scmp.ne.s32.totalorder %s47, %s48
    %p60 = scmp.eq.s32.totalorder %s17, 2
    %p61 = por %p59, %p60
    %p63 = scmp.ne.s32.totalorder %s48, %s62
    %p64 = scmp.eq.s32.totalorder %s17, 0
    %p65 = por %p63, %p64
    %s67 = sadd.s32 %s66, 1
    %p70 = scmp.eq.s32.totalorder %s11, 2
    %p71 = scmp.ne.s32.totalorder %s66, %s68
    %p72 = scmp.eq.s32.totalorder %s11, 0
    %p73 = por %p71, %p72
    %p74 = scmp.ne.s32.totalorder %s66, %s68
    %p75 = scmp.eq.s32.totalorder %s16, 2
    %p76 = por %p74, %p75
    %p77 = scmp.ne.s32.totalorder %s68, %s69
    %p78 = scmp.eq.s32.totalorder %s16, 0
    %p79 = por %p77, %p78
    %p80 = scmp.ne.s32.totalorder %s68, %s69
    %p81 = scmp.eq.s32.totalorder %s17, 2
    %p82 = por %p80, %p81
    %p84 = scmp.ne.s32.totalorder %s69, %s83
    %p85 = scmp.eq.s32.totalorder %s17, 0
    %p86 = por %p84, %p85
    %s88 = sadd.s32 %s87, 1
    %p91 = scmp.eq.s32.totalorder %s11, 2
    %p92 = scmp.ne.s32.totalorder %s87, %s89
    %p93 = scmp.eq.s32.totalorder %s11, 0
    %p94 = por %p92, %p93
    %p95 = scmp.ne.s32.totalorder %s87, %s89
    %p96 = scmp.eq.s32.totalorder %s16, 2
    %p97 = por %p95, %p96
    %p98 = scmp.ne.s32.totalorder %s89, %s90
    %p99 = scmp.eq.s32.totalorder %s16, 0
    %p100 = por %p98, %p99
    %p101 = scmp.ne.s32.totalorder %s89, %s90
    %p102 = scmp.eq.s32.totalorder %s17, 2
    %p103 = por %p101, %p102
    %p105 = scmp.ne.s32.totalorder %s90, %s104
    %p106 = scmp.eq.s32.totalorder %s17, 0
    %p107 = por %p105, %p106
    %s108 = ssub.s32 %s11, %s18
    %p109 = scmp.eq.s32.totalorder %s108, 0
    %s111 = sadd.s32 %s110, 1
    %s112 = scalar_select %p109, %s110, %s111
    %p115 = pneg %p109
    %p116 = scmp.eq.s32.totalorder %s11, 2
    %p117 = por %p115, %p116
    %p118 = scmp.ne.s32.totalorder %s110, %s113
    %p119 = scmp.eq.s32.totalorder %s11, 0
    %p120 = por %p118, %p119
    %p121 = scmp.ne.s32.totalorder %s110, %s113
    %p122 = scmp.eq.s32.totalorder %s16, 2
    %p123 = por %p121, %p122
    %p124 = scmp.ne.s32.totalorder %s113, %s114
    %p125 = scmp.eq.s32.totalorder %s16, 0
    %p126 = por %p124, %p125
    %p127 = scmp.ne.s32.totalorder %s113, %s114
    %p128 = scmp.eq.s32.totalorder %s17, 2
    %p129 = por %p127, %p128
    %p131 = scmp.ne.s32.totalorder %s114, %s130
    %p132 = scmp.eq.s32.totalorder %s17, 0
    %p133 = por %p131, %p132
    %s134 = ssub.s32 %s11, %s18
    %p135 = scmp.eq.s32.totalorder %s134, 0
    %s137 = sadd.s32 %s136, 1
    %s138 = scalar_select %p135, %s136, %s137
    %p141 = pneg %p135
    %p142 = scmp.eq.s32.totalorder %s11, 2
    %p143 = por %p141, %p142
    %p144 = scmp.ne.s32.totalorder %s136, %s139
    %p145 = scmp.eq.s32.totalorder %s11, 0
    %p146 = por %p144, %p145
    %p147 = scmp.ne.s32.totalorder %s136, %s139
    %p148 = scmp.eq.s32.totalorder %s16, 2
    %p149 = por %p147, %p148
    %p150 = scmp.ne.s32.totalorder %s139, %s140
    %p151 = scmp.eq.s32.totalorder %s16, 0
    %p152 = por %p150, %p151
    %p153 = scmp.ne.s32.totalorder %s139, %s140
    %p154 = scmp.eq.s32.totalorder %s17, 2
    %p155 = por %p153, %p154
    %p157 = scmp.ne.s32.totalorder %s140, %s156
    %p158 = scmp.eq.s32.totalorder %s17, 0
    %p159 = por %p157, %p158
    %p160 = scmp.le.s32.totalorder 1, %s11
    %p161 = scmp.lt.s32.totalorder %s11, 4
    %p162 = pnand %p160, %p161
    %p163 = pneg %p162
    // Predicated region
    $region9: #{domain_basic_block_forward.3} parent=5 // pred_check
      _
    $region10: #{domain_basic_block_forward.3} parent=5 // pred_check_branch
      %165 = sbr.rel (%p162) target = $region12
    $region11: #{domain_basic_block_forward.3} parent=5 // pred_region
      %s166 = ssub.s32 %s11, 1
      // Predicated region
      $region13: #{domain_basic_block_forward.3} parent=11 // pred_check
        %p167 = pneg %p58
      $region14: #{domain_basic_block_forward.3} parent=11 // pred_check_branch
        %169 = sbr.rel (%p167) target = $region16
      $region15: #{domain_basic_block_forward.3} parent=11 // pred_region
        _
      $region16: #{domain_basic_block_forward.3} parent=11 // pred_fallthru
        _
      // Predicated region
      $region17: #{domain_basic_block_forward.3} parent=11 // pred_check
        %p170 = pneg %p79
      $region18: #{domain_basic_block_forward.3} parent=11 // pred_check_branch
        %172 = sbr.rel (%p170) target = $region20
      $region19: #{domain_basic_block_forward.3} parent=11 // pred_region
        _
      $region20: #{domain_basic_block_forward.3} parent=11 // pred_fallthru
        _
      // Predicated region
      $region21: #{domain_basic_block_forward.3} parent=11 // pred_check
        %p173 = pneg %p100
      $region22: #{domain_basic_block_forward.3} parent=11 // pred_check_branch
        %175 = sbr.rel (%p173) target = $region24
      $region23: #{domain_basic_block_forward.3} parent=11 // pred_region
        _
      $region24: #{domain_basic_block_forward.3} parent=11 // pred_fallthru
        _
    $region12: #{domain_basic_block_forward.3} parent=5 // pred_fallthru
      _
    %p176 = scmp.lt.s32.totalorder %s11, 3
    // Predicated region
    $region25: #{domain_basic_block_forward.3} parent=5 // pred_check
      %p177 = pneg %p176
    $region26: #{domain_basic_block_forward.3} parent=5 // pred_check_branch
      %179 = sbr.rel (%p177) target = $region28
    $region27: #{domain_basic_block_forward.3} parent=5 // pred_region
      // Predicated region
      $region29: #{domain_basic_block_forward.3} parent=27 // pred_check
        %p180 = pneg %p31
      $region30: #{domain_basic_block_forward.3} parent=27 // pred_check_branch
        %182 = sbr.rel (%p180) target = $region32
      $region31: #{domain_basic_block_forward.3} parent=27 // pred_region
        %s183 = smul.u32 16, %s11
        %p184 = scmp.lt.s32.totalorder %s183, 47
        %s185 = scalar_select %p184, %s183, 47
        %s186 = smul.addr %s185, 7
        %s187 = smul.addr %s186, 4
        %s188 = scalar_lea.vmem %s0, %s187
        %s189 = smul.u32 16, %s11
      $region32: #{domain_basic_block_forward.3} parent=27 // pred_fallthru
        _
      // Predicated region
      $region33: #{domain_basic_block_forward.3} parent=27 // pred_check
        %p190 = pneg %p120
      $region34: #{domain_basic_block_forward.3} parent=27 // pred_check_branch
        %192 = sbr.rel (%p190) target = $region36
      $region35: #{domain_basic_block_forward.3} parent=27 // pred_region
        %s193 = smul.u32 16, %s11
        %p194 = scmp.lt.s32.totalorder %s193, 47
        %s195 = scalar_select %p194, %s193, 47
        %s196 = smul.addr %s195, 8
        %s197 = scalar_lea.vmem %s4, %s196
        %s198 = smul.u32 16, %s11
      $region36: #{domain_basic_block_forward.3} parent=27 // pred_fallthru
        _
    $region28: #{domain_basic_block_forward.3} parent=5 // pred_fallthru
      _
    %p199 = scmp.le.s32.totalorder 1, %s11
    %p200 = scmp.lt.s32.totalorder %s11, 4
    %p201 = pnand %p199, %p200
    %p202 = pneg %p201
    // Predicated region
    $region37: #{domain_basic_block_forward.3} parent=5 // pred_check
      _
    $region38: #{domain_basic_block_forward.3} parent=5 // pred_check_branch
      %204 = sbr.rel (%p201) target = $region40
    $region39: #{domain_basic_block_forward.3} parent=5 // pred_region
      %s205 = ssub.s32 %s11, 1
      %s206 = smul.u32 16, %s16
      %p207 = scmp.lt.s32.totalorder %s206, 47
      %s208 = scalar_select %p207, %s206, 47
      %s209 = smul.addr %s208, 7
      %s210 = smul.addr %s209, 4
      %s211 = scalar_lea.vmem %s0, %s210
      %p212 = pneg %p37
      %p213 = pneg %p34
      %p214 = pneg %p58
      %p215 = pneg %p55
      %p216 = pneg %p79
      %p217 = pneg %p76
      %p218 = pneg %p100
      %p219 = pneg %p97
      %s220 = smul.u32 16, %s16
      %p221 = scmp.lt.s32.totalorder %s220, 47
      %s222 = scalar_select %p221, %s220, 47
      %s223 = smul.addr %s222, 8
      %s224 = scalar_lea.vmem %s4, %s223
      %p225 = pneg %p126
      %p226 = pneg %p123
      %p227 = pneg %p152
      %p228 = pneg %p149
      %s229 = smul.u32 16, %s16
      %p230 = scmp.lt.s32.totalorder %s229, 47
      %s231 = scalar_select %p230, %s229, 47
      %s232 = smul.addr %s231, 8
      %s233 = scalar_lea.vmem %s5, %s232
      %s234 = smul.u32 16, %s16
      %p235 = scmp.lt.s32.totalorder %s234, 47
      %s236 = scalar_select %p235, %s234, 47
      %s237 = smul.addr %s236, 7
      %s238 = smul.addr %s237, 4
      %s239 = scalar_lea.vmem %s0, %s238
      %s240 = smul.u32 16, %s16
      %s241 = smul.u32 16, %s16
      %p242 = scmp.lt.s32.totalorder %s241, 47
      %s243 = scalar_select %p242, %s241, 47
      %s244 = smul.addr %s243, 8
      %s245 = scalar_lea.vmem %s4, %s244
      %s246 = smul.u32 16, %s16
      %s247 = smul.u32 16, %s16
      %p248 = scmp.lt.s32.totalorder %s247, 47
      %s249 = scalar_select %p248, %s247, 47
      %s250 = smul.addr %s249, 8
      %s251 = scalar_lea.vmem %s5, %s250
      %s252 = smul.u32 16, %s16
      %v254 = vld [vmem:[%s239] sm:$0xff]
      %v255 = vld [vmem:[%s239 + $0x8] sm:$0xff]
      %v256 = vld [vmem:[%s239 + $0x10] sm:$0xff]
      %v257 = vld [vmem:[%s239 + $0x18] sm:$0xf]
      %v258 = vld [vmem:[%s239 + $0x1c] sm:$0xff]
      %v259 = vld [vmem:[%s239 + $0x24] sm:$0xff]
      %v260 = vld [vmem:[%s239 + $0x2c] sm:$0xff]
      %v261 = vld [vmem:[%s239 + $0x34] sm:$0xf]
      %v262 = vld [vmem:[%s239 + $0x38] sm:$0xff]
      %v263 = vld [vmem:[%s239 + $0x40] sm:$0xff]
      %v264 = vld [vmem:[%s239 + $0x48] sm:$0xff]
      %v265 = vld [vmem:[%s239 + $0x50] sm:$0xf]
      %v266 = vld [vmem:[%s239 + $0x54] sm:$0xff]
      %v267 = vld [vmem:[%s239 + $0x5c] sm:$0xff]
      %v268 = vld [vmem:[%s239 + $0x64] sm:$0xff]
      %v269 = vld [vmem:[%s239 + $0x6c] sm:$0xf]
      %v270 = vld [vmem:[%s239 + $0x70] sm:$0xff]
      %v271 = vld [vmem:[%s239 + $0x78] sm:$0xff]
      %v272 = vld [vmem:[%s239 + $0x80] sm:$0xff]
      %v273 = vld [vmem:[%s239 + $0x88] sm:$0xf]
      %v274 = vld [vmem:[%s239 + $0x8c] sm:$0xff]
      %v275 = vld [vmem:[%s239 + $0x94] sm:$0xff]
      %v276 = vld [vmem:[%s239 + $0x9c] sm:$0xff]
      %v277 = vld [vmem:[%s239 + $0xa4] sm:$0xf]
      %v278 = vld [vmem:[%s239 + $0xa8] sm:$0xff]
      %v279 = vld [vmem:[%s239 + $0xb0] sm:$0xff]
      %v280 = vld [vmem:[%s239 + $0xb8] sm:$0xff]
      %v281 = vld [vmem:[%s239 + $0xc0] sm:$0xf]
      %v282 = vld [vmem:[%s239 + $0xc4] sm:$0xff]
      %v283 = vld [vmem:[%s239 + $0xcc] sm:$0xff]
      %v284 = vld [vmem:[%s239 + $0xd4] sm:$0xff]
      %v285 = vld [vmem:[%s239 + $0xdc] sm:$0xf]
      %v286 = vld [vmem:[%s239 + $0xe0] sm:$0xff]
      %v287 = vld [vmem:[%s239 + $0xe8] sm:$0xff]
      %v288 = vld [vmem:[%s239 + $0xf0] sm:$0xff]
      %v289 = vld [vmem:[%s239 + $0xf8] sm:$0xf]
      %v290 = vld [vmem:[%s239 + $0xfc] sm:$0xff]
      %v291 = vld [vmem:[%s239 + $0x104] sm:$0xff]
      %v292 = vld [vmem:[%s239 + $0x10c] sm:$0xff]
      %v293 = vld [vmem:[%s239 + $0x114] sm:$0xf]
      %v294 = vld [vmem:[%s239 + $0x118] sm:$0xff]
      %v295 = vld [vmem:[%s239 + $0x120] sm:$0xff]
      %v296 = vld [vmem:[%s239 + $0x128] sm:$0xff]
      %v297 = vld [vmem:[%s239 + $0x130] sm:$0xf]
      %v298 = vld [vmem:[%s239 + $0x134] sm:$0xff]
      %v299 = vld [vmem:[%s239 + $0x13c] sm:$0xff]
      %v300 = vld [vmem:[%s239 + $0x144] sm:$0xff]
      %v301 = vld [vmem:[%s239 + $0x14c] sm:$0xf]
      %v302 = vld [vmem:[%s239 + $0x150] sm:$0xff]
      %v303 = vld [vmem:[%s239 + $0x158] sm:$0xff]
      %v304 = vld [vmem:[%s239 + $0x160] sm:$0xff]
      %v305 = vld [vmem:[%s239 + $0x168] sm:$0xf]
      %v306 = vld [vmem:[%s239 + $0x16c] sm:$0xff]
      %v307 = vld [vmem:[%s239 + $0x174] sm:$0xff]
      %v308 = vld [vmem:[%s239 + $0x17c] sm:$0xff]
      %v309 = vld [vmem:[%s239 + $0x184] sm:$0xf]
      %v310 = vld [vmem:[%s239 + $0x188] sm:$0xff]
      %v311 = vld [vmem:[%s239 + $0x190] sm:$0xff]
      %v312 = vld [vmem:[%s239 + $0x198] sm:$0xff]
      %v313 = vld [vmem:[%s239 + $0x1a0] sm:$0xf]
      %v314 = vld [vmem:[%s239 + $0x1a4] sm:$0xff]
      %v315 = vld [vmem:[%s239 + $0x1ac] sm:$0xff]
      %v316 = vld [vmem:[%s239 + $0x1b4] sm:$0xff]
      %v317 = vld [vmem:[%s239 + $0x1bc] sm:$0xf]
      %v318 = vld [vmem:[%s1] sm:$0xf]
      %v319 = vld [vmem:[%s1 + $0x4] sm:$0xf]
      %v320 = vld [vmem:[%s1 + $0x8] sm:$0xf]
      %v321 = vld [vmem:[%s1 + $0xc] sm:$0xf]
      %v322 = vld [vmem:[%s1 + $0x10] sm:$0xf]
      %v323 = vld [vmem:[%s1 + $0x14] sm:$0xf]
      %v324 = vld [vmem:[%s1 + $0x18] sm:$0xf]
      %v325 = vld [vmem:[%s1 + $0x1c] sm:$0xf]
      %v326 = vld [vmem:[%s1 + $0x20] sm:$0xf]
      %v327 = vld [vmem:[%s1 + $0x24] sm:$0xf]
      %v328 = vld [vmem:[%s1 + $0x28] sm:$0xf]
      %v329 = vld [vmem:[%s1 + $0x2c] sm:$0xf]
      %v330 = vld [vmem:[%s1 + $0x30] sm:$0xf]
      %v331 = vld [vmem:[%s1 + $0x34] sm:$0xf]
      %v332 = vld [vmem:[%s1 + $0x38] sm:$0xf]
      %v333 = vld [vmem:[%s1 + $0x3c] sm:$0xf]
      %v334 = vld [vmem:[%s1 + $0x40] sm:$0xf]
      %v335 = vld [vmem:[%s1 + $0x44] sm:$0xf]
      %v336 = vld [vmem:[%s1 + $0x48] sm:$0xf]
      %v337 = vld [vmem:[%s1 + $0x4c] sm:$0xf]
      %v338 = vld [vmem:[%s1 + $0x50] sm:$0xf]
      %v339 = vld [vmem:[%s1 + $0x54] sm:$0xf]
      %v340 = vld [vmem:[%s1 + $0x58] sm:$0xf]
      %v341 = vld [vmem:[%s1 + $0x5c] sm:$0xf]
      %v342 = vld [vmem:[%s1 + $0x60] sm:$0xf]
      %v343 = vld [vmem:[%s1 + $0x64] sm:$0xf]
      %v344 = vld [vmem:[%s1 + $0x68] sm:$0xf]
      %v345 = vld [vmem:[%s1 + $0x6c] sm:$0xf]
      %v346 = vld [vmem:[%s1 + $0x70] sm:$0xf]
      %v347 = vld [vmem:[%s1 + $0x74] sm:$0xf]
      %v348 = vld [vmem:[%s1 + $0x78] sm:$0xf]
      %v349 = vld [vmem:[%s1 + $0x7c] sm:$0xf]
      %v350 = vld [vmem:[%s1 + $0x80] sm:$0xf]
      %v351 = vld [vmem:[%s1 + $0x84] sm:$0xf]
      %v352 = vld [vmem:[%s1 + $0x88] sm:$0xf]
      %v353 = vld [vmem:[%s1 + $0x8c] sm:$0xf]
      %v354 = vld [vmem:[%s1 + $0x90] sm:$0xf]
      %v355 = vld [vmem:[%s1 + $0x94] sm:$0xf]
      %v356 = vld [vmem:[%s1 + $0x98] sm:$0xf]
      %v357 = vld [vmem:[%s1 + $0x9c] sm:$0xf]
      %v358 = vld [vmem:[%s1 + $0xa0] sm:$0xf]
      %v359 = vld [vmem:[%s1 + $0xa4] sm:$0xf]
      %v360 = vld [vmem:[%s1 + $0xa8] sm:$0xf]
      %v361 = vld [vmem:[%s1 + $0xac] sm:$0xf]
      %v362 = vld [vmem:[%s1 + $0xb0] sm:$0xf]
      %v363 = vld [vmem:[%s1 + $0xb4] sm:$0xf]
      %v364 = vld [vmem:[%s1 + $0xb8] sm:$0xf]
      %v365 = vld [vmem:[%s1 + $0xbc] sm:$0xf]
      %v366 = vld [vmem:[%s1 + $0xc0] sm:$0xf]
      %v367 = vld [vmem:[%s1 + $0xc4] sm:$0xf]
      %v368 = vld [vmem:[%s1 + $0xc8] sm:$0xf]
      %v369 = vld [vmem:[%s1 + $0xcc] sm:$0xf]
      %v370 = vld [vmem:[%s1 + $0xd0] sm:$0xf]
      %v371 = vld [vmem:[%s1 + $0xd4] sm:$0xf]
      %v372 = vld [vmem:[%s1 + $0xd8] sm:$0xf]
      %v373 = vld [vmem:[%s1 + $0xdc] sm:$0xf]
      %v374 = vld [vmem:[%s1 + $0xe0] sm:$0xf]
      %v375 = vld [vmem:[%s1 + $0xe4] sm:$0xf]
      %v376 = vld [vmem:[%s1 + $0xe8] sm:$0xf]
      %v377 = vld [vmem:[%s1 + $0xec] sm:$0xf]
      %v378 = vld [vmem:[%s1 + $0xf0] sm:$0xf]
      %v379 = vld [vmem:[%s1 + $0xf4] sm:$0xf]
      %v380 = vld [vmem:[%s1 + $0xf8] sm:$0xf]
      %v381 = vld [vmem:[%s1 + $0xfc] sm:$0xf]
      %v382 = vld [vmem:[%s1 + $0x100] sm:$0xf]
      %v383 = vld [vmem:[%s1 + $0x104] sm:$0xf]
      %v384 = vld [vmem:[%s1 + $0x108] sm:$0xf]
      %v385 = vld [vmem:[%s1 + $0x10c] sm:$0xf]
      %v386 = vld [vmem:[%s1 + $0x110] sm:$0xf]
      %v387 = vld [vmem:[%s1 + $0x114] sm:$0xf]
      %v388 = vld [vmem:[%s1 + $0x118] sm:$0xf]
      %v389 = vld [vmem:[%s1 + $0x11c] sm:$0xf]
      %v390 = vld [vmem:[%s1 + $0x120] sm:$0xf]
      %v391 = vld [vmem:[%s1 + $0x124] sm:$0xf]
      %v392 = vld [vmem:[%s1 + $0x128] sm:$0xf]
      %v393 = vld [vmem:[%s1 + $0x12c] sm:$0xf]
      %v394 = vld [vmem:[%s1 + $0x130] sm:$0xf]
      %v395 = vld [vmem:[%s1 + $0x134] sm:$0xf]
      %v396 = vld [vmem:[%s1 + $0x138] sm:$0xf]
      %v397 = vld [vmem:[%s1 + $0x13c] sm:$0xf]
      %v398 = vld [vmem:[%s1 + $0x140] sm:$0xf]
      %v399 = vld [vmem:[%s1 + $0x144] sm:$0xf]
      %v400 = vld [vmem:[%s1 + $0x148] sm:$0xf]
      %v401 = vld [vmem:[%s1 + $0x14c] sm:$0xf]
      %v402 = vld [vmem:[%s1 + $0x150] sm:$0xf]
      %v403 = vld [vmem:[%s1 + $0x154] sm:$0xf]
      %v404 = vld [vmem:[%s1 + $0x158] sm:$0xf]
      %v405 = vld [vmem:[%s1 + $0x15c] sm:$0xf]
      %v406 = vld [vmem:[%s1 + $0x160] sm:$0xf]
      %v407 = vld [vmem:[%s1 + $0x164] sm:$0xf]
      %v408 = vld [vmem:[%s1 + $0x168] sm:$0xf]
      %v409 = vld [vmem:[%s1 + $0x16c] sm:$0xf]
      %v410 = vld [vmem:[%s1 + $0x170] sm:$0xf]
      %v411 = vld [vmem:[%s1 + $0x174] sm:$0xf]
      %v412 = vld [vmem:[%s1 + $0x178] sm:$0xf]
      %v413 = vld [vmem:[%s1 + $0x17c] sm:$0xf]
      %v414 = vld [vmem:[%s1 + $0x180] sm:$0xf]
      %v415 = vld [vmem:[%s1 + $0x184] sm:$0xf]
      %v416 = vld [vmem:[%s1 + $0x188] sm:$0xf]
      %v417 = vld [vmem:[%s1 + $0x18c] sm:$0xf]
      %v418 = vld [vmem:[%s1 + $0x190] sm:$0xf]
      %v419 = vld [vmem:[%s1 + $0x194] sm:$0xf]
      %v420 = vld [vmem:[%s1 + $0x198] sm:$0xf]
      %v421 = vld [vmem:[%s1 + $0x19c] sm:$0xf]
      %v422 = vld [vmem:[%s1 + $0x1a0] sm:$0xf]
      %v423 = vld [vmem:[%s1 + $0x1a4] sm:$0xf]
      %v424 = vld [vmem:[%s1 + $0x1a8] sm:$0xf]
      %v425 = vld [vmem:[%s1 + $0x1ac] sm:$0xf]
      %v490 = vunpack.c.l.b16 %v254
      %v491 = vunpack.c.h.b16 %v254
      %v492 = vunpack.c.l.b16 %v255
      %v493 = vunpack.c.h.b16 %v255
      %v494 = vunpack.c.l.b16 %v256
      %v495 = vunpack.c.h.b16 %v256
      %v496 = vunpack.c.l.b16 %v257
      %v497 = vunpack.c.l.b16 %v258
      %v498 = vunpack.c.h.b16 %v258
      %v499 = vunpack.c.l.b16 %v259
      %v500 = vunpack.c.h.b16 %v259
      %v501 = vunpack.c.l.b16 %v260
      %v502 = vunpack.c.h.b16 %v260
      %v503 = vunpack.c.l.b16 %v261
      %v504 = vunpack.c.l.b16 %v262
      %v505 = vunpack.c.h.b16 %v262
      %v506 = vunpack.c.l.b16 %v263
      %v507 = vunpack.c.h.b16 %v263
      %v508 = vunpack.c.l.b16 %v264
      %v509 = vunpack.c.h.b16 %v264
      %v510 = vunpack.c.l.b16 %v265
      %v511 = vunpack.c.l.b16 %v266
      %v512 = vunpack.c.h.b16 %v266
      %v513 = vunpack.c.l.b16 %v267
      %v514 = vunpack.c.h.b16 %v267
      %v515 = vunpack.c.l.b16 %v268
      %v516 = vunpack.c.h.b16 %v268
      %v517 = vunpack.c.l.b16 %v269
      %v518 = vunpack.c.l.b16 %v270
      %v519 = vunpack.c.h.b16 %v270
      %v520 = vunpack.c.l.b16 %v271
      %v521 = vunpack.c.h.b16 %v271
      %v522 = vunpack.c.l.b16 %v272
      %v523 = vunpack.c.h.b16 %v272
      %v524 = vunpack.c.l.b16 %v273
      %v525 = vunpack.c.l.b16 %v274
      %v526 = vunpack.c.h.b16 %v274
      %v527 = vunpack.c.l.b16 %v275
      %v528 = vunpack.c.h.b16 %v275
      %v529 = vunpack.c.l.b16 %v276
      %v530 = vunpack.c.h.b16 %v276
      %v531 = vunpack.c.l.b16 %v277
      %v532 = vunpack.c.l.b16 %v278
      %v533 = vunpack.c.h.b16 %v278
      %v534 = vunpack.c.l.b16 %v279
      %v535 = vunpack.c.h.b16 %v279
      %v536 = vunpack.c.l.b16 %v280
      %v537 = vunpack.c.h.b16 %v280
      %v538 = vunpack.c.l.b16 %v281
      %v539 = vunpack.c.l.b16 %v282
      %v540 = vunpack.c.h.b16 %v282
      %v541 = vunpack.c.l.b16 %v283
      %v542 = vunpack.c.h.b16 %v283
      %v543 = vunpack.c.l.b16 %v284
      %v544 = vunpack.c.h.b16 %v284
      %v545 = vunpack.c.l.b16 %v285
      %v546 = vunpack.c.l.b16 %v286
      %v547 = vunpack.c.h.b16 %v286
      %v548 = vunpack.c.l.b16 %v287
      %v549 = vunpack.c.h.b16 %v287
      %v550 = vunpack.c.l.b16 %v288
      %v551 = vunpack.c.h.b16 %v288
      %v552 = vunpack.c.l.b16 %v289
      %v553 = vunpack.c.l.b16 %v290
      %v554 = vunpack.c.h.b16 %v290
      %v555 = vunpack.c.l.b16 %v291
      %v556 = vunpack.c.h.b16 %v291
      %v557 = vunpack.c.l.b16 %v292
      %v558 = vunpack.c.h.b16 %v292
      %v559 = vunpack.c.l.b16 %v293
      %v560 = vunpack.c.l.b16 %v294
      %v561 = vunpack.c.h.b16 %v294
      %v562 = vunpack.c.l.b16 %v295
      %v563 = vunpack.c.h.b16 %v295
      %v564 = vunpack.c.l.b16 %v296
      %v565 = vunpack.c.h.b16 %v296
      %v566 = vunpack.c.l.b16 %v297
      %v567 = vunpack.c.l.b16 %v298
      %v568 = vunpack.c.h.b16 %v298
      %v569 = vunpack.c.l.b16 %v299
      %v570 = vunpack.c.h.b16 %v299
      %v571 = vunpack.c.l.b16 %v300
      %v572 = vunpack.c.h.b16 %v300
      %v573 = vunpack.c.l.b16 %v301
      %v574 = vunpack.c.l.b16 %v302
      %v575 = vunpack.c.h.b16 %v302
      %v576 = vunpack.c.l.b16 %v303
      %v577 = vunpack.c.h.b16 %v303
      %v578 = vunpack.c.l.b16 %v304
      %v579 = vunpack.c.h.b16 %v304
      %v580 = vunpack.c.l.b16 %v305
      %v581 = vunpack.c.l.b16 %v306
      %v582 = vunpack.c.h.b16 %v306
      %v583 = vunpack.c.l.b16 %v307
      %v584 = vunpack.c.h.b16 %v307
      %v585 = vunpack.c.l.b16 %v308
      %v586 = vunpack.c.h.b16 %v308
      %v587 = vunpack.c.l.b16 %v309
      %v588 = vunpack.c.l.b16 %v310
      %v589 = vunpack.c.h.b16 %v310
      %v590 = vunpack.c.l.b16 %v311
      %v591 = vunpack.c.h.b16 %v311
      %v592 = vunpack.c.l.b16 %v312
      %v593 = vunpack.c.h.b16 %v312
      %v594 = vunpack.c.l.b16 %v313
      %v595 = vunpack.c.l.b16 %v314
      %v596 = vunpack.c.h.b16 %v314
      %v597 = vunpack.c.l.b16 %v315
      %v598 = vunpack.c.h.b16 %v315
      %v599 = vunpack.c.l.b16 %v316
      %v600 = vunpack.c.h.b16 %v316
      %v601 = vunpack.c.l.b16 %v317
      %v602 = vpack.c.b16 %v497, %v490
      %v603 = vpack.c.b16 %v498, %v491
      %v604 = vpack.c.b16 %v499, %v492
      %v605 = vpack.c.b16 %v500, %v493
      %v606 = vpack.c.b16 %v501, %v494
      %v607 = vpack.c.b16 %v502, %v495
      %v608 = vpack.c.b16 %v503, %v496
      %v609 = vpack.c.b16 %v511, %v504
      %v610 = vpack.c.b16 %v512, %v505
      %v611 = vpack.c.b16 %v513, %v506
      %v612 = vpack.c.b16 %v514, %v507
      %v613 = vpack.c.b16 %v515, %v508
      %v614 = vpack.c.b16 %v516, %v509
      %v615 = vpack.c.b16 %v517, %v510
      %v616 = vpack.c.b16 %v525, %v518
      %v617 = vpack.c.b16 %v526, %v519
      %v618 = vpack.c.b16 %v527, %v520
      %v619 = vpack.c.b16 %v528, %v521
      %v620 = vpack.c.b16 %v529, %v522
      %v621 = vpack.c.b16 %v530, %v523
      %v622 = vpack.c.b16 %v531, %v524
      %v623 = vpack.c.b16 %v539, %v532
      %v624 = vpack.c.b16 %v540, %v533
      %v625 = vpack.c.b16 %v541, %v534
      %v626 = vpack.c.b16 %v542, %v535
      %v627 = vpack.c.b16 %v543, %v536
      %v628 = vpack.c.b16 %v544, %v537
      %v629 = vpack.c.b16 %v545, %v538
      %v630 = vpack.c.b16 %v553, %v546
      %v631 = vpack.c.b16 %v554, %v547
      %v632 = vpack.c.b16 %v555, %v548
      %v633 = vpack.c.b16 %v556, %v549
      %v634 = vpack.c.b16 %v557, %v550
      %v635 = vpack.c.b16 %v558, %v551
      %v636 = vpack.c.b16 %v559, %v552
      %v637 = vpack.c.b16 %v567, %v560
      %v638 = vpack.c.b16 %v568, %v561
      %v639 = vpack.c.b16 %v569, %v562
      %v640 = vpack.c.b16 %v570, %v563
      %v641 = vpack.c.b16 %v571, %v564
      %v642 = vpack.c.b16 %v572, %v565
      %v643 = vpack.c.b16 %v573, %v566
      %v644 = vpack.c.b16 %v581, %v574
      %v645 = vpack.c.b16 %v582, %v575
      %v646 = vpack.c.b16 %v583, %v576
      %v647 = vpack.c.b16 %v584, %v577
      %v648 = vpack.c.b16 %v585, %v578
      %v649 = vpack.c.b16 %v586, %v579
      %v650 = vpack.c.b16 %v587, %v580
      %v651 = vpack.c.b16 %v595, %v588
      %v652 = vpack.c.b16 %v596, %v589
      %v653 = vpack.c.b16 %v597, %v590
      %v654 = vpack.c.b16 %v598, %v591
      %v655 = vpack.c.b16 %v599, %v592
      %v656 = vpack.c.b16 %v600, %v593
      %v657 = vpack.c.b16 %v601, %v594
      %v814 = vunpack.c.l.b16 %v318
      %v815 = vunpack.c.l.b16 %v319
      %v816 = vunpack.c.l.b16 %v320
      %v817 = vunpack.c.l.b16 %v321
      %v818 = vunpack.c.l.b16 %v322
      %v819 = vunpack.c.l.b16 %v323
      %v820 = vunpack.c.l.b16 %v324
      %v821 = vunpack.c.l.b16 %v325
      %v822 = vunpack.c.l.b16 %v326
      %v823 = vunpack.c.l.b16 %v327
      %v824 = vunpack.c.l.b16 %v328
      %v825 = vunpack.c.l.b16 %v329
      %v826 = vunpack.c.l.b16 %v330
      %v827 = vunpack.c.l.b16 %v331
      %v828 = vunpack.c.l.b16 %v332
      %v829 = vunpack.c.l.b16 %v333
      %v830 = vunpack.c.l.b16 %v334
      %v831 = vunpack.c.l.b16 %v335
      %v832 = vunpack.c.l.b16 %v336
      %v833 = vunpack.c.l.b16 %v337
      %v834 = vunpack.c.l.b16 %v338
      %v835 = vunpack.c.l.b16 %v339
      %v836 = vunpack.c.l.b16 %v340
      %v837 = vunpack.c.l.b16 %v341
      %v838 = vunpack.c.l.b16 %v342
      %v839 = vunpack.c.l.b16 %v343
      %v840 = vunpack.c.l.b16 %v344
      %v841 = vunpack.c.l.b16 %v345
      %v842 = vunpack.c.l.b16 %v346
      %v843 = vunpack.c.l.b16 %v347
      %v844 = vunpack.c.l.b16 %v348
      %v845 = vunpack.c.l.b16 %v349
      %v846 = vunpack.c.l.b16 %v350
      %v847 = vunpack.c.l.b16 %v351
      %v848 = vunpack.c.l.b16 %v352
      %v849 = vunpack.c.l.b16 %v353
      %v850 = vunpack.c.l.b16 %v354
      %v851 = vunpack.c.l.b16 %v355
      %v852 = vunpack.c.l.b16 %v356
      %v853 = vunpack.c.l.b16 %v357
      %v854 = vunpack.c.l.b16 %v358
      %v855 = vunpack.c.l.b16 %v359
      %v856 = vunpack.c.l.b16 %v360
      %v857 = vunpack.c.l.b16 %v361
      %v858 = vunpack.c.l.b16 %v362
      %v859 = vunpack.c.l.b16 %v363
      %v860 = vunpack.c.l.b16 %v364
      %v861 = vunpack.c.l.b16 %v365
      %v862 = vunpack.c.l.b16 %v366
      %v863 = vunpack.c.l.b16 %v367
      %v864 = vunpack.c.l.b16 %v368
      %v865 = vunpack.c.l.b16 %v369
      %v866 = vunpack.c.l.b16 %v370
      %v867 = vunpack.c.l.b16 %v371
      %v868 = vunpack.c.l.b16 %v372
      %v869 = vunpack.c.l.b16 %v373
      %v870 = vunpack.c.l.b16 %v374
      %v871 = vunpack.c.l.b16 %v375
      %v872 = vunpack.c.l.b16 %v376
      %v873 = vunpack.c.l.b16 %v377
      %v874 = vunpack.c.l.b16 %v378
      %v875 = vunpack.c.l.b16 %v379
      %v876 = vunpack.c.l.b16 %v380
      %v877 = vunpack.c.l.b16 %v381
      %v878 = vunpack.c.l.b16 %v382
      %v879 = vunpack.c.l.b16 %v383
      %v880 = vunpack.c.l.b16 %v384
      %v881 = vunpack.c.l.b16 %v385
      %v882 = vunpack.c.l.b16 %v386
      %v883 = vunpack.c.l.b16 %v387
      %v884 = vunpack.c.l.b16 %v388
      %v885 = vunpack.c.l.b16 %v389
      %v886 = vunpack.c.l.b16 %v390
      %v887 = vunpack.c.l.b16 %v391
      %v888 = vunpack.c.l.b16 %v392
      %v889 = vunpack.c.l.b16 %v393
      %v890 = vunpack.c.l.b16 %v394
      %v891 = vunpack.c.l.b16 %v395
      %v892 = vunpack.c.l.b16 %v396
      %v893 = vunpack.c.l.b16 %v397
      %v894 = vunpack.c.l.b16 %v398
      %v895 = vunpack.c.l.b16 %v399
      %v896 = vunpack.c.l.b16 %v400
      %v897 = vunpack.c.l.b16 %v401
      %v898 = vunpack.c.l.b16 %v402
      %v899 = vunpack.c.l.b16 %v403
      %v900 = vunpack.c.l.b16 %v404
      %v901 = vunpack.c.l.b16 %v405
      %v902 = vunpack.c.l.b16 %v406
      %v903 = vunpack.c.l.b16 %v407
      %v904 = vunpack.c.l.b16 %v408
      %v905 = vunpack.c.l.b16 %v409
      %v906 = vunpack.c.l.b16 %v410
      %v907 = vunpack.c.l.b16 %v411
      %v908 = vunpack.c.l.b16 %v412
      %v909 = vunpack.c.l.b16 %v413
      %v910 = vunpack.c.l.b16 %v414
      %v911 = vunpack.c.l.b16 %v415
      %v912 = vunpack.c.l.b16 %v416
      %v913 = vunpack.c.l.b16 %v417
      %v914 = vunpack.c.l.b16 %v418
      %v915 = vunpack.c.l.b16 %v419
      %v916 = vunpack.c.l.b16 %v420
      %v917 = vunpack.c.l.b16 %v421
      %v918 = vunpack.c.l.b16 %v422
      %v919 = vunpack.c.l.b16 %v423
      %v920 = vunpack.c.l.b16 %v424
      %v921 = vunpack.c.l.b16 %v425
      %v922 = vpack.c.b16 %v815, %v814
      %v923 = vpack.c.b16 %v817, %v816
      %v924 = vpack.c.b16 %v819, %v818
      %v925 = vpack.c.b16 %v821, %v820
      %v926 = vpack.c.b16 %v823, %v822
      %v927 = vpack.c.b16 %v825, %v824
      %v928 = vpack.c.b16 %v827, %v826
      %v929 = vpack.c.b16 %v829, %v828
      %v930 = vpack.c.b16 %v831, %v830
      %v931 = vpack.c.b16 %v833, %v832
      %v932 = vpack.c.b16 %v835, %v834
      %v933 = vpack.c.b16 %v837, %v836
      %v934 = vpack.c.b16 %v839, %v838
      %v935 = vpack.c.b16 %v841, %v840
      %v936 = vpack.c.b16 %v843, %v842
      %v937 = vpack.c.b16 %v845, %v844
      %v938 = vpack.c.b16 %v847, %v846
      %v939 = vpack.c.b16 %v849, %v848
      %v940 = vpack.c.b16 %v851, %v850
      %v941 = vpack.c.b16 %v853, %v852
      %v942 = vpack.c.b16 %v855, %v854
      %v943 = vpack.c.b16 %v857, %v856
      %v944 = vpack.c.b16 %v859, %v858
      %v945 = vpack.c.b16 %v861, %v860
      %v946 = vpack.c.b16 %v863, %v862
      %v947 = vpack.c.b16 %v865, %v864
      %v948 = vpack.c.b16 %v867, %v866
      %v949 = vpack.c.b16 %v869, %v868
      %v950 = vpack.c.b16 %v871, %v870
      %v951 = vpack.c.b16 %v873, %v872
      %v952 = vpack.c.b16 %v875, %v874
      %v953 = vpack.c.b16 %v877, %v876
      %v954 = vpack.c.b16 %v879, %v878
      %v955 = vpack.c.b16 %v881, %v880
      %v956 = vpack.c.b16 %v883, %v882
      %v957 = vpack.c.b16 %v885, %v884
      %v958 = vpack.c.b16 %v887, %v886
      %v959 = vpack.c.b16 %v889, %v888
      %v960 = vpack.c.b16 %v891, %v890
      %v961 = vpack.c.b16 %v893, %v892
      %v962 = vpack.c.b16 %v895, %v894
      %v963 = vpack.c.b16 %v897, %v896
      %v964 = vpack.c.b16 %v899, %v898
      %v965 = vpack.c.b16 %v901, %v900
      %v966 = vpack.c.b16 %v903, %v902
      %v967 = vpack.c.b16 %v905, %v904
      %v968 = vpack.c.b16 %v907, %v906
      %v969 = vpack.c.b16 %v909, %v908
      %v970 = vpack.c.b16 %v911, %v910
      %v971 = vpack.c.b16 %v913, %v912
      %v972 = vpack.c.b16 %v915, %v914
      %v973 = vpack.c.b16 %v917, %v916
      %v974 = vpack.c.b16 %v919, %v918
      %v975 = vpack.c.b16 %v921, %v920
      %vm1030 = vcmask 785408
      %v1032 = vsel %vm1030, %v608, 0
      %v1035 = vsel %vm1030, %v615, 0
      %v1038 = vsel %vm1030, %v622, 0
      %v1041 = vsel %vm1030, %v629, 0
      %v1044 = vsel %vm1030, %v636, 0
      %v1047 = vsel %vm1030, %v643, 0
      %v1050 = vsel %vm1030, %v650, 0
      %v1053 = vsel %vm1030, %v657, 0
      %1055 = vmatprep.subr.bf16.mxu0 0
      %1056 = vmatpush1.bf16.msra.mxu0 %v922
      %1057 = vmatprep.subr.bf16.mxu0 0
      %1058 = vmatpush1.bf16.msra.mxu0 %v923
      %1059 = vmatprep.subr.bf16.mxu0 0
      %1060 = vmatpush1.bf16.msra.mxu0 %v924
      %1061 = vmatprep.subr.bf16.mxu0 0
      %1062 = vmatpush1.bf16.msra.mxu0 %v925
      %1063 = vmatprep.subr.bf16.mxu0 0
      %1064 = vmatpush1.bf16.msra.mxu0 %v926
      %1065 = vmatprep.subr.bf16.mxu0 0
      %1066 = vmatpush1.bf16.msra.mxu0 %v927
      %1067 = vmatprep.subr.bf16.mxu0 0
      %1068 = vmatpush1.bf16.msra.mxu0 %v928
      %1069 = vmatprep.subr.bf16.mxu0 0
      %1070 = vmatpush1.bf16.msra.mxu0 %v929
      %1071 = vmatprep.subr.bf16.mxu0 0
      %1072 = vmatpush1.bf16.msra.mxu0 %v930
      %1073 = vmatprep.subr.bf16.mxu0 0
      %1074 = vmatpush1.bf16.msra.mxu0 %v931
      %1075 = vmatprep.subr.bf16.mxu0 0
      %1076 = vmatpush1.bf16.msra.mxu0 %v932
      %1077 = vmatprep.subr.bf16.mxu0 0
      %1078 = vmatpush1.bf16.msra.mxu0 %v933
      %1079 = vmatprep.subr.bf16.mxu0 0
      %1080 = vmatpush1.bf16.msra.mxu0 %v934
      %1081 = vmatprep.subr.bf16.mxu0 0
      %1082 = vmatpush1.bf16.msra.mxu0 %v935
      %1083 = vmatprep.subr.bf16.mxu0 0
      %1084 = vmatpush1.bf16.msra.mxu0 %v936
      %1085 = vmatprep.subr.bf16.mxu0 0
      %1086 = vmatpush1.bf16.msra.mxu0 %v937
      %1087 = vmatprep.mubr.bf16.mxu0 %v603
      %1088 = vmatmul.mubr.bf16.gmra.mrb[0].mxu0 %v602
      %v1089 = vpop.f32.mrb[0].mxu0
      %v1090 = vadd.f32 0.0, %v1089
      %v1091 = vpop.f32.mrb[0].mxu0
      %v1092 = vpop.f32.mrb[0].mxu0
      %v1093 = vadd.f32 0.0, %v1092
      %v1094 = vpop.f32.mrb[0].mxu0
      %1095 = vmatprep.mubr.bf16.mxu0 %v610
      %1096 = vmatmul.mubr.bf16.gmra.mrb[0].mxu0 %v609
      %v1097 = vpop.f32.mrb[0].mxu0
      %v1098 = vadd.f32 0.0, %v1097
      %v1099 = vpop.f32.mrb[0].mxu0
      %v1100 = vpop.f32.mrb[0].mxu0
      %v1101 = vadd.f32 0.0, %v1100
      %v1102 = vpop.f32.mrb[0].mxu0
      %1103 = vmatprep.mubr.bf16.mxu0 %v617
      %1104 = vmatmul.mubr.bf16.gmra.mrb[0].mxu0 %v616
      %v1105 = vpop.f32.mrb[0].mxu0
      %v1106 = vadd.f32 0.0, %v1105
      %v1107 = vpop.f32.mrb[0].mxu0
      %v1108 = vpop.f32.mrb[0].mxu0
      %v1109 = vadd.f32 0.0, %v1108
      %v1110 = vpop.f32.mrb[0].mxu0
      %1111 = vmatprep.mubr.bf16.mxu0 %v624
      %1112 = vmatmul.mubr.bf16.gmra.mrb[0].mxu0 %v623
      %v1113 = vpop.f32.mrb[0].mxu0
      %v1114 = vadd.f32 0.0, %v1113
      %v1115 = vpop.f32.mrb[0].mxu0
      %v1116 = vpop.f32.mrb[0].mxu0
      %v1117 = vadd.f32 0.0, %v1116
      %v1118 = vpop.f32.mrb[0].mxu0
      %1119 = vmatprep.mubr.bf16.mxu0 %v631
      %1120 = vmatmul.mubr.bf16.gmra.mrb[0].mxu0 %v630
      %v1121 = vpop.f32.mrb[0].mxu0
      %v1122 = vadd.f32 0.0, %v1121
      %v1123 = vpop.f32.mrb[0].mxu0
      %v1124 = vpop.f32.mrb[0].mxu0
      %v1125 = vadd.f32 0.0, %v1124
      %v1126 = vpop.f32.mrb[0].mxu0
      %1127 = vmatprep.mubr.bf16.mxu0 %v638
      %1128 = vmatmul.mubr.bf16.gmra.mrb[0].mxu0 %v637
      %v1129 = vpop.f32.mrb[0].mxu0
      %v1130 = vadd.f32 0.0, %v1129
      %v1131 = vpop.f32.mrb[0].mxu0
      %v1132 = vpop.f32.mrb[0].mxu0
      %v1133 = vadd.f32 0.0, %v1132
      %v1134 = vpop.f32.mrb[0].mxu0
      %1135 = vmatprep.mubr.bf16.mxu0 %v645
      %1136 = vmatmul.mubr.bf16.gmra.mrb[0].mxu0 %v644
      %v1137 = vpop.f32.mrb[0].mxu0
      %v1138 = vadd.f32 0.0, %v1137
      %v1139 = vpop.f32.mrb[0].mxu0
      %v1140 = vpop.f32.mrb[0].mxu0
      %v1141 = vadd.f32 0.0, %v1140
      %v1142 = vpop.f32.mrb[0].mxu0
      %1143 = vmatprep.mubr.bf16.mxu0 %v652
      %1144 = vmatmul.mubr.bf16.gmra.mrb[0].mxu0 %v651
      %v1145 = vpop.f32.mrb[0].mxu0
      %v1146 = vadd.f32 0.0, %v1145
      %v1147 = vpop.f32.mrb[0].mxu0
      %v1148 = vpop.f32.mrb[0].mxu0
      %v1149 = vadd.f32 0.0, %v1148
      %v1150 = vpop.f32.mrb[0].mxu0
      %1151 = vdwg.mxu0
      %1152 = vmatprep.subr.bf16.mxu0 0
      %1153 = vmatpush1.bf16.msra.mxu0 %v938
      %1154 = vmatprep.subr.bf16.mxu0 0
      %1155 = vmatpush1.bf16.msra.mxu0 %v939
      %1156 = vmatprep.subr.bf16.mxu0 0
      %1157 = vmatpush1.bf16.msra.mxu0 %v940
      %1158 = vmatprep.subr.bf16.mxu0 0
      %1159 = vmatpush1.bf16.msra.mxu0 %v941
      %1160 = vmatprep.subr.bf16.mxu0 0
      %1161 = vmatpush1.bf16.msra.mxu0 %v942
      %1162 = vmatprep.subr.bf16.mxu0 0
      %1163 = vmatpush1.bf16.msra.mxu0 %v943
      %1164 = vmatprep.subr.bf16.mxu0 0
      %1165 = vmatpush1.bf16.msra.mxu0 %v944
      %1166 = vmatprep.subr.bf16.mxu0 0
      %1167 = vmatpush1.bf16.msra.mxu0 %v945
      %1168 = vmatprep.subr.bf16.mxu0 0
      %1169 = vmatpush1.bf16.msra.mxu0 %v946
      %1170 = vmatprep.subr.bf16.mxu0 0
      %1171 = vmatpush1.bf16.msra.mxu0 %v947
      %1172 = vmatprep.subr.bf16.mxu0 0
      %1173 = vmatpush1.bf16.msra.mxu0 %v948
      %1174 = vmatprep.subr.bf16.mxu0 0
      %1175 = vmatpush1.bf16.msra.mxu0 %v949
      %1176 = vmatprep.subr.bf16.mxu0 0
      %1177 = vmatpush1.bf16.msra.mxu0 %v950
      %1178 = vmatprep.subr.bf16.mxu0 0
      %1179 = vmatpush1.bf16.msra.mxu0 %v951
      %1180 = vmatprep.subr.bf16.mxu0 0
      %1181 = vmatpush1.bf16.msra.mxu0 %v952
      %1182 = vmatprep.subr.bf16.mxu0 0
      %1183 = vmatpush1.bf16.msra.mxu0 %v953
      %1184 = vmatprep.mubr.bf16.mxu0 %v605
      %1185 = vmatmul.mubr.bf16.gmra.mrb[0].mxu0 %v604
      %v1186 = vpop.f32.mrb[0].mxu0
      %v1187 = vadd.f32 %v1090, %v1186
      %v1188 = vpop.f32.mrb[0].mxu0
      %v1189 = vpop.f32.mrb[0].mxu0
      %v1190 = vadd.f32 %v1093, %v1189
      %v1191 = vpop.f32.mrb[0].mxu0
      %1192 = vmatprep.mubr.bf16.mxu0 %v612
      %1193 = vmatmul.mubr.bf16.gmra.mrb[0].mxu0 %v611
      %v1194 = vpop.f32.mrb[0].mxu0
      %v1195 = vadd.f32 %v1098, %v1194
      %v1196 = vpop.f32.mrb[0].mxu0
      %v1197 = vpop.f32.mrb[0].mxu0
      %v1198 = vadd.f32 %v1101, %v1197
      %v1199 = vpop.f32.mrb[0].mxu0
      %1200 = vmatprep.mubr.bf16.mxu0 %v619
      %1201 = vmatmul.mubr.bf16.gmra.mrb[0].mxu0 %v618
      %v1202 = vpop.f32.mrb[0].mxu0
      %v1203 = vadd.f32 %v1106, %v1202
      %v1204 = vpop.f32.mrb[0].mxu0
      %v1205 = vpop.f32.mrb[0].mxu0
      %v1206 = vadd.f32 %v1109, %v1205
      %v1207 = vpop.f32.mrb[0].mxu0
      %1208 = vmatprep.mubr.bf16.mxu0 %v626
      %1209 = vmatmul.mubr.bf16.gmra.mrb[0].mxu0 %v625
      %v1210 = vpop.f32.mrb[0].mxu0
      %v1211 = vadd.f32 %v1114, %v1210
      %v1212 = vpop.f32.mrb[0].mxu0
      %v1213 = vpop.f32.mrb[0].mxu0
      %v1214 = vadd.f32 %v1117, %v1213
      %v1215 = vpop.f32.mrb[0].mxu0
      %1216 = vmatprep.mubr.bf16.mxu0 %v633
      %1217 = vmatmul.mubr.bf16.gmra.mrb[0].mxu0 %v632
      %v1218 = vpop.f32.mrb[0].mxu0
      %v1219 = vadd.f32 %v1122, %v1218
      %v1220 = vpop.f32.mrb[0].mxu0
      %v1221 = vpop.f32.mrb[0].mxu0
      %v1222 = vadd.f32 %v1125, %v1221
      %v1223 = vpop.f32.mrb[0].mxu0
      %1224 = vmatprep.mubr.bf16.mxu0 %v640
      %1225 = vmatmul.mubr.bf16.gmra.mrb[0].mxu0 %v639
      %v1226 = vpop.f32.mrb[0].mxu0
      %v1227 = vadd.f32 %v1130, %v1226
      %v1228 = vpop.f32.mrb[0].mxu0
      %v1229 = vpop.f32.mrb[0].mxu0
      %v1230 = vadd.f32 %v1133, %v1229
      %v1231 = vpop.f32.mrb[0].mxu0
      %1232 = vmatprep.mubr.bf16.mxu0 %v647
      %1233 = vmatmul.mubr.bf16.gmra.mrb[0].mxu0 %v646
      %v1234 = vpop.f32.mrb[0].mxu0
      %v1235 = vadd.f32 %v1138, %v1234
      %v1236 = vpop.f32.mrb[0].mxu0
      %v1237 = vpop.f32.mrb[0].mxu0
      %v1238 = vadd.f32 %v1141, %v1237
      %v1239 = vpop.f32.mrb[0].mxu0
      %1240 = vmatprep.mubr.bf16.mxu0 %v654
      %1241 = vmatmul.mubr.bf16.gmra.mrb[0].mxu0 %v653
      %v1242 = vpop.f32.mrb[0].mxu0
      %v1243 = vadd.f32 %v1146, %v1242
      %v1244 = vpop.f32.mrb[0].mxu0
      %v1245 = vpop.f32.mrb[0].mxu0
      %v1246 = vadd.f32 %v1149, %v1245
      %v1247 = vpop.f32.mrb[0].mxu0
      %1248 = vdwg.mxu0
      %1249 = vmatprep.subr.bf16.mxu0 0
      %1250 = vmatpush1.bf16.msra.mxu0 %v954
      %1251 = vmatprep.subr.bf16.mxu0 0
      %1252 = vmatpush1.bf16.msra.mxu0 %v955
      %1253 = vmatprep.subr.bf16.mxu0 0
      %1254 = vmatpush1.bf16.msra.mxu0 %v956
      %1255 = vmatprep.subr.bf16.mxu0 0
      %1256 = vmatpush1.bf16.msra.mxu0 %v957
      %1257 = vmatprep.subr.bf16.mxu0 0
      %1258 = vmatpush1.bf16.msra.mxu0 %v958
      %1259 = vmatprep.subr.bf16.mxu0 0
      %1260 = vmatpush1.bf16.msra.mxu0 %v959
      %1261 = vmatprep.subr.bf16.mxu0 0
      %1262 = vmatpush1.bf16.msra.mxu0 %v960
      %1263 = vmatprep.subr.bf16.mxu0 0
      %1264 = vmatpush1.bf16.msra.mxu0 %v961
      %1265 = vmatprep.subr.bf16.mxu0 0
      %1266 = vmatpush1.bf16.msra.mxu0 %v962
      %1267 = vmatprep.subr.bf16.mxu0 0
      %1268 = vmatpush1.bf16.msra.mxu0 %v963
      %1269 = vmatprep.subr.bf16.mxu0 0
      %1270 = vmatpush1.bf16.msra.mxu0 %v964
      %1271 = vmatprep.subr.bf16.mxu0 0
      %1272 = vmatpush1.bf16.msra.mxu0 %v965
      %1273 = vmatprep.subr.bf16.mxu0 0
      %1274 = vmatpush1.bf16.msra.mxu0 %v966
      %1275 = vmatprep.subr.bf16.mxu0 0
      %1276 = vmatpush1.bf16.msra.mxu0 %v967
      %1277 = vmatprep.subr.bf16.mxu0 0
      %1278 = vmatpush1.bf16.msra.mxu0 %v968
      %1279 = vmatprep.subr.bf16.mxu0 0
      %1280 = vmatpush1.bf16.msra.mxu0 %v969
      %1281 = vmatprep.mubr.bf16.mxu0 %v607
      %1282 = vmatmul.mubr.bf16.gmra.mrb[0].mxu0 %v606
      %v1283 = vpop.f32.mrb[0].mxu0
      %v1284 = vadd.f32 %v1187, %v1283
      %v1285 = vpop.f32.mrb[0].mxu0
      %v1286 = vpop.f32.mrb[0].mxu0
      %v1287 = vadd.f32 %v1190, %v1286
      %v1288 = vpop.f32.mrb[0].mxu0
      %1289 = vmatprep.mubr.bf16.mxu0 %v614
      %1290 = vmatmul.mubr.bf16.gmra.mrb[0].mxu0 %v613
      %v1291 = vpop.f32.mrb[0].mxu0
      %v1292 = vadd.f32 %v1195, %v1291
      %v1293 = vpop.f32.mrb[0].mxu0
      %v1294 = vpop.f32.mrb[0].mxu0
      %v1295 = vadd.f32 %v1198, %v1294
      %v1296 = vpop.f32.mrb[0].mxu0
      %1297 = vmatprep.mubr.bf16.mxu0 %v621
      %1298 = vmatmul.mubr.bf16.gmra.mrb[0].mxu0 %v620
      %v1299 = vpop.f32.mrb[0].mxu0
      %v1300 = vadd.f32 %v1203, %v1299
      %v1301 = vpop.f32.mrb[0].mxu0
      %v1302 = vpop.f32.mrb[0].mxu0
      %v1303 = vadd.f32 %v1206, %v1302
      %v1304 = vpop.f32.mrb[0].mxu0
      %1305 = vmatprep.mubr.bf16.mxu0 %v628
      %1306 = vmatmul.mubr.bf16.gmra.mrb[0].mxu0 %v627
      %v1307 = vpop.f32.mrb[0].mxu0
      %v1308 = vadd.f32 %v1211, %v1307
      %v1309 = vpop.f32.mrb[0].mxu0
      %v1310 = vpop.f32.mrb[0].mxu0
      %v1311 = vadd.f32 %v1214, %v1310
      %v1312 = vpop.f32.mrb[0].mxu0
      %1313 = vmatprep.mubr.bf16.mxu0 %v635
      %1314 = vmatmul.mubr.bf16.gmra.mrb[0].mxu0 %v634
      %v1315 = vpop.f32.mrb[0].mxu0
      %v1316 = vadd.f32 %v1219, %v1315
      %v1317 = vpop.f32.mrb[0].mxu0
      %v1318 = vpop.f32.mrb[0].mxu0
      %v1319 = vadd.f32 %v1222, %v1318
      %v1320 = vpop.f32.mrb[0].mxu0
      %1321 = vmatprep.mubr.bf16.mxu0 %v642
      %1322 = vmatmul.mubr.bf16.gmra.mrb[0].mxu0 %v641
      %v1323 = vpop.f32.mrb[0].mxu0
      %v1324 = vadd.f32 %v1227, %v1323
      %v1325 = vpop.f32.mrb[0].mxu0
      %v1326 = vpop.f32.mrb[0].mxu0
      %v1327 = vadd.f32 %v1230, %v1326
      %v1328 = vpop.f32.mrb[0].mxu0
      %1329 = vmatprep.mubr.bf16.mxu0 %v649
      %1330 = vmatmul.mubr.bf16.gmra.mrb[0].mxu0 %v648
      %v1331 = vpop.f32.mrb[0].mxu0
      %v1332 = vadd.f32 %v1235, %v1331
      %v1333 = vpop.f32.mrb[0].mxu0
      %v1334 = vpop.f32.mrb[0].mxu0
      %v1335 = vadd.f32 %v1238, %v1334
      %v1336 = vpop.f32.mrb[0].mxu0
      %1337 = vmatprep.mubr.bf16.mxu0 %v656
      %1338 = vmatmul.mubr.bf16.gmra.mrb[0].mxu0 %v655
      %v1339 = vpop.f32.mrb[0].mxu0
      %v1340 = vadd.f32 %v1243, %v1339
      %v1341 = vpop.f32.mrb[0].mxu0
      %v1342 = vpop.f32.mrb[0].mxu0
      %v1343 = vadd.f32 %v1246, %v1342
      %v1344 = vpop.f32.mrb[0].mxu0
      %1345 = vdwg.mxu0
      %1346 = vmatprep.subr.bf16.mxu0 0
      %1347 = vmatpush1.bf16.msra.mxu0 %v970
      %1348 = vmatprep.subr.bf16.mxu0 0
      %1349 = vmatpush1.bf16.msra.mxu0 %v971
      %1350 = vmatprep.subr.bf16.mxu0 0
      %1351 = vmatpush1.bf16.msra.mxu0 %v972
      %1352 = vmatprep.subr.bf16.mxu0 0
      %1353 = vmatpush1.bf16.msra.mxu0 %v973
      %1354 = vmatprep.subr.bf16.mxu0 0
      %1355 = vmatpush1.bf16.msra.mxu0 %v974
      %1356 = vmatprep.subr.bf16.mxu0 0
      %1357 = vmatpush1.bf16.msra.mxu0 %v975
      %1358 = vmatprep.subr.bf16.mxu0 0
      %1359 = vmatpush1.bf16.msra.mxu0 0
      %1360 = vmatprep.subr.bf16.mxu0 0
      %1361 = vmatpush1.bf16.msra.mxu0 0
      %1362 = vmatprep.subr.bf16.mxu0 0
      %1363 = vmatpush1.bf16.msra.mxu0 0
      %1364 = vmatprep.subr.bf16.mxu0 0
      %1365 = vmatpush1.bf16.msra.mxu0 0
      %1366 = vmatprep.subr.bf16.mxu0 0
      %1367 = vmatpush1.bf16.msra.mxu0 0
      %1368 = vmatprep.subr.bf16.mxu0 0
      %1369 = vmatpush1.bf16.msra.mxu0 0
      %1370 = vmatprep.subr.bf16.mxu0 0
      %1371 = vmatpush1.bf16.msra.mxu0 0
      %1372 = vmatprep.subr.bf16.mxu0 0
      %1373 = vmatpush1.bf16.msra.mxu0 0
      %1374 = vmatprep.subr.bf16.mxu0 0
      %1375 = vmatpush1.bf16.msra.mxu0 0
      %1376 = vmatprep.subr.bf16.mxu0 0
      %1377 = vmatpush1.bf16.msra.mxu0 0
      %1378 = vmatprep.mubr.bf16.mxu0 0
      %1379 = vmatmul.mubr.bf16.gmra.mrb[0].mxu0 %v1032
      %v1380 = vpop.f32.mrb[0].mxu0
      %v1381 = vadd.f32 %v1284, %v1380
      %v1382 = vpop.f32.mrb[0].mxu0
      %v1383 = vpop.f32.mrb[0].mxu0
      %v1384 = vadd.f32 %v1287, %v1383
      %v1385 = vpop.f32.mrb[0].mxu0
      %1386 = vmatprep.mubr.bf16.mxu0 0
      %1387 = vmatmul.mubr.bf16.gmra.mrb[0].mxu0 %v1035
      %v1388 = vpop.f32.mrb[0].mxu0
      %v1389 = vadd.f32 %v1292, %v1388
      %v1390 = vpop.f32.mrb[0].mxu0
      %v1391 = vpop.f32.mrb[0].mxu0
      %v1392 = vadd.f32 %v1295, %v1391
      %v1393 = vpop.f32.mrb[0].mxu0
      %1394 = vmatprep.mubr.bf16.mxu0 0
      %1395 = vmatmul.mubr.bf16.gmra.mrb[0].mxu0 %v1038
      %v1396 = vpop.f32.mrb[0].mxu0
      %v1397 = vadd.f32 %v1300, %v1396
      %v1398 = vpop.f32.mrb[0].mxu0
      %v1399 = vpop.f32.mrb[0].mxu0
      %v1400 = vadd.f32 %v1303, %v1399
      %v1401 = vpop.f32.mrb[0].mxu0
      %1402 = vmatprep.mubr.bf16.mxu0 0
      %1403 = vmatmul.mubr.bf16.gmra.mrb[0].mxu0 %v1041
      %v1404 = vpop.f32.mrb[0].mxu0
      %v1405 = vadd.f32 %v1308, %v1404
      %v1406 = vpop.f32.mrb[0].mxu0
      %v1407 = vpop.f32.mrb[0].mxu0
      %v1408 = vadd.f32 %v1311, %v1407
      %v1409 = vpop.f32.mrb[0].mxu0
      %1410 = vmatprep.mubr.bf16.mxu0 0
      %1411 = vmatmul.mubr.bf16.gmra.mrb[0].mxu0 %v1044
      %v1412 = vpop.f32.mrb[0].mxu0
      %v1413 = vadd.f32 %v1316, %v1412
      %v1414 = vpop.f32.mrb[0].mxu0
      %v1415 = vpop.f32.mrb[0].mxu0
      %v1416 = vadd.f32 %v1319, %v1415
      %v1417 = vpop.f32.mrb[0].mxu0
      %1418 = vmatprep.mubr.bf16.mxu0 0
      %1419 = vmatmul.mubr.bf16.gmra.mrb[0].mxu0 %v1047
      %v1420 = vpop.f32.mrb[0].mxu0
      %v1421 = vadd.f32 %v1324, %v1420
      %v1422 = vpop.f32.mrb[0].mxu0
      %v1423 = vpop.f32.mrb[0].mxu0
      %v1424 = vadd.f32 %v1327, %v1423
      %v1425 = vpop.f32.mrb[0].mxu0
      %1426 = vmatprep.mubr.bf16.mxu0 0
      %1427 = vmatmul.mubr.bf16.gmra.mrb[0].mxu0 %v1050
      %v1428 = vpop.f32.mrb[0].mxu0
      %v1429 = vadd.f32 %v1332, %v1428
      %v1430 = vpop.f32.mrb[0].mxu0
      %v1431 = vpop.f32.mrb[0].mxu0
      %v1432 = vadd.f32 %v1335, %v1431
      %v1433 = vpop.f32.mrb[0].mxu0
      %1434 = vmatprep.mubr.bf16.mxu0 0
      %1435 = vmatmul.mubr.bf16.gmra.mrb[0].mxu0 %v1053
      %v1436 = vpop.f32.mrb[0].mxu0
      %v1437 = vadd.f32 %v1340, %v1436
      %v1438 = vpop.f32.mrb[0].mxu0
      %v1439 = vpop.f32.mrb[0].mxu0
      %v1440 = vadd.f32 %v1343, %v1439
      %v1441 = vpop.f32.mrb[0].mxu0
      %1442 = vdwg.mxu0
      %v1443 = vld [vmem:[%s2] sm:$0x1]
      %v1445 = vlaneseq
      %v1446 = vshrl.u32 %v1445, 7
      %v1447 = vsub.s32 0, %v1446
      %v1448 = vrot.slane %v1443, %v1447
      %v1450 = vmul.f32 %v1381, %v1448
      %v1451 = vmul.f32 %v1384, %v1448
      %v1452 = vmul.f32 %v1389, %v1448
      %v1453 = vmul.f32 %v1392, %v1448
      %v1454 = vmul.f32 %v1397, %v1448
      %v1455 = vmul.f32 %v1400, %v1448
      %v1456 = vmul.f32 %v1405, %v1448
      %v1457 = vmul.f32 %v1408, %v1448
      %v1458 = vmul.f32 %v1413, %v1448
      %v1459 = vmul.f32 %v1416, %v1448
      %v1460 = vmul.f32 %v1421, %v1448
      %v1461 = vmul.f32 %v1424, %v1448
      %v1462 = vmul.f32 %v1429, %v1448
      %v1463 = vmul.f32 %v1432, %v1448
      %v1464 = vmul.f32 %v1437, %v1448
      %v1465 = vmul.f32 %v1440, %v1448
      %v1466 = vld [vmem:[%s3] sm:$0x1]
      %v1468 = vlaneseq
      %v1469 = vshrl.u32 %v1468, 7
      %v1470 = vsub.s32 0, %v1469
      %v1471 = vrot.slane %v1466, %v1470
      %v1473 = vadd.f32 %v1450, %v1471
      %v1474 = vadd.f32 %v1451, %v1471
      %v1475 = vadd.f32 %v1452, %v1471
      %v1476 = vadd.f32 %v1453, %v1471
      %v1477 = vadd.f32 %v1454, %v1471
      %v1478 = vadd.f32 %v1455, %v1471
      %v1479 = vadd.f32 %v1456, %v1471
      %v1480 = vadd.f32 %v1457, %v1471
      %v1481 = vadd.f32 %v1458, %v1471
      %v1482 = vadd.f32 %v1459, %v1471
      %v1483 = vadd.f32 %v1460, %v1471
      %v1484 = vadd.f32 %v1461, %v1471
      %v1485 = vadd.f32 %v1462, %v1471
      %v1486 = vadd.f32 %v1463, %v1471
      %v1487 = vadd.f32 %v1464, %v1471
      %v1488 = vadd.f32 %v1465, %v1471
      %v1489 = vld [vmem:[%s245] sm:$0xff]
      %v1490 = vld [vmem:[%s245 + $0x8] sm:$0xff]
      %v1491 = vld [vmem:[%s245 + $0x10] sm:$0xff]
      %v1492 = vld [vmem:[%s245 + $0x18] sm:$0xff]
      %v1493 = vld [vmem:[%s245 + $0x20] sm:$0xff]
      %v1494 = vld [vmem:[%s245 + $0x28] sm:$0xff]
      %v1495 = vld [vmem:[%s245 + $0x30] sm:$0xff]
      %v1496 = vld [vmem:[%s245 + $0x38] sm:$0xff]
      %v1497 = vld [vmem:[%s245 + $0x40] sm:$0xff]
      %v1498 = vld [vmem:[%s245 + $0x48] sm:$0xff]
      %v1499 = vld [vmem:[%s245 + $0x50] sm:$0xff]
      %v1500 = vld [vmem:[%s245 + $0x58] sm:$0xff]
      %v1501 = vld [vmem:[%s245 + $0x60] sm:$0xff]
      %v1502 = vld [vmem:[%s245 + $0x68] sm:$0xff]
      %v1503 = vld [vmem:[%s245 + $0x70] sm:$0xff]
      %v1504 = vld [vmem:[%s245 + $0x78] sm:$0xff]
      %v1505 = vadd.f32 %v1473, %v1489
      %v1506 = vadd.f32 %v1474, %v1490
      %v1507 = vadd.f32 %v1475, %v1491
      %v1508 = vadd.f32 %v1476, %v1492
      %v1509 = vadd.f32 %v1477, %v1493
      %v1510 = vadd.f32 %v1478, %v1494
      %v1511 = vadd.f32 %v1479, %v1495
      %v1512 = vadd.f32 %v1480, %v1496
      %v1513 = vadd.f32 %v1481, %v1497
      %v1514 = vadd.f32 %v1482, %v1498
      %v1515 = vadd.f32 %v1483, %v1499
      %v1516 = vadd.f32 %v1484, %v1500
      %v1517 = vadd.f32 %v1485, %v1501
      %v1518 = vadd.f32 %v1486, %v1502
      %v1519 = vadd.f32 %v1487, %v1503
      %v1520 = vadd.f32 %v1488, %v1504
      %v1521 = vmax.f32 %v1505, 0.0
      %v1522 = vmax.f32 %v1506, 0.0
      %v1523 = vmax.f32 %v1507, 0.0
      %v1524 = vmax.f32 %v1508, 0.0
      %v1525 = vmax.f32 %v1509, 0.0
      %v1526 = vmax.f32 %v1510, 0.0
      %v1527 = vmax.f32 %v1511, 0.0
      %v1528 = vmax.f32 %v1512, 0.0
      %v1529 = vmax.f32 %v1513, 0.0
      %v1530 = vmax.f32 %v1514, 0.0
      %v1531 = vmax.f32 %v1515, 0.0
      %v1532 = vmax.f32 %v1516, 0.0
      %v1533 = vmax.f32 %v1517, 0.0
      %v1534 = vmax.f32 %v1518, 0.0
      %v1535 = vmax.f32 %v1519, 0.0
      %v1536 = vmax.f32 %v1520, 0.0
      %vm1537 = vcmask 261120
      %1538 = vst.msk [vmem:[%s251] sm:$0xff] %vm1537, %v1521
      %1539 = vst.msk [vmem:[%s251 + $0x8] sm:$0xff] %vm1537, %v1522
      %1540 = vst.msk [vmem:[%s251 + $0x10] sm:$0xff] %vm1537, %v1523
      %1541 = vst.msk [vmem:[%s251 + $0x18] sm:$0xff] %vm1537, %v1524
      %1542 = vst.msk [vmem:[%s251 + $0x20] sm:$0xff] %vm1537, %v1525
      %1543 = vst.msk [vmem:[%s251 + $0x28] sm:$0xff] %vm1537, %v1526
      %1544 = vst.msk [vmem:[%s251 + $0x30] sm:$0xff] %vm1537, %v1527
      %1545 = vst.msk [vmem:[%s251 + $0x38] sm:$0xff] %vm1537, %v1528
      %1546 = vst.msk [vmem:[%s251 + $0x40] sm:$0xff] %vm1537, %v1529
      %1547 = vst.msk [vmem:[%s251 + $0x48] sm:$0xff] %vm1537, %v1530
      %1548 = vst.msk [vmem:[%s251 + $0x50] sm:$0xff] %vm1537, %v1531
      %1549 = vst.msk [vmem:[%s251 + $0x58] sm:$0xff] %vm1537, %v1532
      %1550 = vst.msk [vmem:[%s251 + $0x60] sm:$0xff] %vm1537, %v1533
      %1551 = vst.msk [vmem:[%s251 + $0x68] sm:$0xff] %vm1537, %v1534
      %1552 = vst.msk [vmem:[%s251 + $0x70] sm:$0xff] %vm1537, %v1535
      %1553 = vst.msk [vmem:[%s251 + $0x78] sm:$0xff] %vm1537, %v1536
      %s1554 = smul.u32 16, %s16
      %p1555 = scmp.lt.s32.totalorder %s1554, 47
      %s1556 = scalar_select %p1555, %s1554, 47
      %s1557 = smul.addr %s1556, 8
      %s1558 = scalar_lea.vmem %s5, %s1557
      // Predicated region
      $region41: #{domain_basic_block_forward.3} parent=39 // pred_check
        %p1559 = pneg %p149
      $region42: #{domain_basic_block_forward.3} parent=39 // pred_check_branch
        %1561 = sbr.rel (%p1559) target = $region44
      $region43: #{domain_basic_block_forward.3} parent=39 // pred_region
        %s1562 = smul.u32 16, %s16
      $region44: #{domain_basic_block_forward.3} parent=39 // pred_fallthru
        _
    $region40: #{domain_basic_block_forward.3} parent=5 // pred_fallthru
      _
    %p1563 = scmp.le.s32.totalorder 2, %s11
    // Predicated region
    $region45: #{domain_basic_block_forward.3} parent=5 // pred_check
      %p1564 = pneg %p1563
    $region46: #{domain_basic_block_forward.3} parent=5 // pred_check_branch
      %1566 = sbr.rel (%p1564) target = $region48
    $region47: #{domain_basic_block_forward.3} parent=5 // pred_region
      %s1567 = ssub.s32 %s11, 2
      // Predicated region
      $region49: #{domain_basic_block_forward.3} parent=47 // pred_check
        %p1568 = pneg %p155
      $region50: #{domain_basic_block_forward.3} parent=47 // pred_check_branch
        %1570 = sbr.rel (%p1568) target = $region52
      $region51: #{domain_basic_block_forward.3} parent=47 // pred_region
        %s1571 = smul.u32 16, %s17
        %p1572 = scmp.lt.s32.totalorder %s1571, 47
        %s1573 = scalar_select %p1572, %s1571, 47
        %s1574 = smul.addr %s1573, 8
        %s1575 = scalar_lea.vmem %s5, %s1574
      $region52: #{domain_basic_block_forward.3} parent=47 // pred_fallthru
        _
    $region48: #{domain_basic_block_forward.3} parent=5 // pred_fallthru
      _
  $region6: #{domain_basic_block_forward.3} parent=0 // loop_footer
    %s15 = sadd.s32 1, %s11
  $region7: #{domain_basic_block_forward.3} parent=0 // loop_footer_branch
    %10 = sbr.rel target = $region3
  $region8: #{domain_basic_block_forward.3} parent=0 // loop_exit
    _

// kernel: domain_basic_block_forward.2
$region0: #{domain_basic_block_forward.2}
  #allocation0 [shape = 'u32[]', space=smem, size = 0x4, offset = 0x4, fixed_abs, tag = 'smem constant byte address 0x4 - core index']
  #allocation1 [shape = 'u32[144,128]{1,0:T(1,128)}', space=vmem, size = 0x12000, scoped, tag = 'internal scratch']
  %s0 = inlined_call_operand.vmem [shape: bf16[384,864], index: 0, kind: input, shape index: {}]
  %s1 = inlined_call_operand.vmem [shape: bf16[864,32], index: 1, kind: input, shape index: {}]
  %s2 = inlined_call_operand.vmem [shape: f32[1,32], index: 2, kind: input, shape index: {}]
  %s3 = inlined_call_operand.vmem [shape: f32[1,32], index: 3, kind: input, shape index: {}]
  %s4 = inlined_call_operand.vmem [shape: f32[384,32], index: 4, kind: output, shape index: {}]
  %s5 = sld [smem:[#allocation0]]
  $region49: #{domain_basic_block_forward.2} parent=0
    _
  %s7 = ssub.s32 1, %s5
  %s8 = scalar_select 0, %s7, %s5
  loop: start=0, step=1, limit=5
  $region2: #{domain_basic_block_forward.2} parent=0 // loop_pre_header
    _
  $region3: #{domain_basic_block_forward.2} parent=0 // loop_header
    %s10 = sphi 0, %s14
    %p11 = scmp.ge.s32.totalorder %s10, 5
    %s20 = sphi 0, %s22
    %s23 = sphi 0, %s20
    %s24 = sphi 0, %s23
    %s40 = sphi 0, %s24
    %s44 = sphi 0, %s44
    %s46 = sphi 0, %s44
    %s47 = sphi 0, %s46
    %s61 = sphi 0, %s47
    %s65 = sphi 0, %s65
    %s67 = sphi 0, %s65
    %s68 = sphi 0, %s67
    %s82 = sphi 0, %s68
    %s86 = sphi 0, %s86
    %s88 = sphi 0, %s86
    %s89 = sphi 0, %s88
    %s103 = sphi 0, %s89
    %s109 = sphi 0, %s111
    %s112 = sphi 0, %s109
    %s113 = sphi 0, %s112
    %s129 = sphi 0, %s113
  $region4: #{domain_basic_block_forward.2} parent=0 // loop_header_branch
    %13 = sbr.rel (%p11) target = $region8
  $region5: #{domain_basic_block_forward.2} parent=0 // loop_body
    %s15 = ssub.s32 %s10, 1
    %s16 = ssub.s32 %s10, 2
    %s17 = sadd.s32 %s10, 1
    %s18 = ssub.s32 %s10, %s17
    %p19 = scmp.eq.s32.totalorder %s18, 0
    %s21 = sadd.s32 %s20, 1
    %s22 = scalar_select %p19, %s20, %s21
    %p25 = pneg %p19
    %p26 = scmp.eq.s32.totalorder %s10, 2
    %p27 = por %p25, %p26
    %p28 = scmp.ne.s32.totalorder %s20, %s23
    %p29 = scmp.eq.s32.totalorder %s10, 0
    %p30 = por %p28, %p29
    %p31 = scmp.ne.s32.totalorder %s20, %s23
    %p32 = scmp.eq.s32.totalorder %s15, 2
    %p33 = por %p31, %p32
    %p34 = scmp.ne.s32.totalorder %s23, %s24
    %p35 = scmp.eq.s32.totalorder %s15, 0
    %p36 = por %p34, %p35
    %p37 = scmp.ne.s32.totalorder %s23, %s24
    %p38 = scmp.eq.s32.totalorder %s16, 2
    %p39 = por %p37, %p38
    %p41 = scmp.ne.s32.totalorder %s24, %s40
    %p42 = scmp.eq.s32.totalorder %s16, 0
    %p43 = por %p41, %p42
    %s45 = sadd.s32 %s44, 1
    %p48 = scmp.eq.s32.totalorder %s10, 2
    %p49 = scmp.ne.s32.totalorder %s44, %s46
    %p50 = scmp.eq.s32.totalorder %s10, 0
    %p51 = por %p49, %p50
    %p52 = scmp.ne.s32.totalorder %s44, %s46
    %p53 = scmp.eq.s32.totalorder %s15, 2
    %p54 = por %p52, %p53
    %p55 = scmp.ne.s32.totalorder %s46, %s47
    %p56 = scmp.eq.s32.totalorder %s15, 0
    %p57 = por %p55, %p56
    %p58 = scmp.ne.s32.totalorder %s46, %s47
    %p59 = scmp.eq.s32.totalorder %s16, 2
    %p60 = por %p58, %p59
    %p62 = scmp.ne.s32.totalorder %s47, %s61
    %p63 = scmp.eq.s32.totalorder %s16, 0
    %p64 = por %p62, %p63
    %s66 = sadd.s32 %s65, 1
    %p69 = scmp.eq.s32.totalorder %s10, 2
    %p70 = scmp.ne.s32.totalorder %s65, %s67
    %p71 = scmp.eq.s32.totalorder %s10, 0
    %p72 = por %p70, %p71
    %p73 = scmp.ne.s32.totalorder %s65, %s67
    %p74 = scmp.eq.s32.totalorder %s15, 2
    %p75 = por %p73, %p74
    %p76 = scmp.ne.s32.totalorder %s67, %s68
    %p77 = scmp.eq.s32.totalorder %s15, 0
    %p78 = por %p76, %p77
    %p79 = scmp.ne.s32.totalorder %s67, %s68
    %p80 = scmp.eq.s32.totalorder %s16, 2
    %p81 = por %p79, %p80
    %p83 = scmp.ne.s32.totalorder %s68, %s82
    %p84 = scmp.eq.s32.totalorder %s16, 0
    %p85 = por %p83, %p84
    %s87 = sadd.s32 %s86, 1
    %p90 = scmp.eq.s32.totalorder %s10, 2
    %p91 = scmp.ne.s32.totalorder %s86, %s88
    %p92 = scmp.eq.s32.totalorder %s10, 0
    %p93 = por %p91, %p92
    %p94 = scmp.ne.s32.totalorder %s86, %s88
    %p95 = scmp.eq.s32.totalorder %s15, 2
    %p96 = por %p94, %p95
    %p97 = scmp.ne.s32.totalorder %s88, %s89
    %p98 = scmp.eq.s32.totalorder %s15, 0
    %p99 = por %p97, %p98
    %p100 = scmp.ne.s32.totalorder %s88, %s89
    %p101 = scmp.eq.s32.totalorder %s16, 2
    %p102 = por %p100, %p101
    %p104 = scmp.ne.s32.totalorder %s89, %s103
    %p105 = scmp.eq.s32.totalorder %s16, 0
    %p106 = por %p104, %p105
    %s107 = ssub.s32 %s10, %s17
    %p108 = scmp.eq.s32.totalorder %s107, 0
    %s110 = sadd.s32 %s109, 1
    %s111 = scalar_select %p108, %s109, %s110
    %p114 = pneg %p108
    %p115 = scmp.eq.s32.totalorder %s10, 2
    %p116 = por %p114, %p115
    %p117 = scmp.ne.s32.totalorder %s109, %s112
    %p118 = scmp.eq.s32.totalorder %s10, 0
    %p119 = por %p117, %p118
    %p120 = scmp.ne.s32.totalorder %s109, %s112
    %p121 = scmp.eq.s32.totalorder %s15, 2
    %p122 = por %p120, %p121
    %p123 = scmp.ne.s32.totalorder %s112, %s113
    %p124 = scmp.eq.s32.totalorder %s15, 0
    %p125 = por %p123, %p124
    %p126 = scmp.ne.s32.totalorder %s112, %s113
    %p127 = scmp.eq.s32.totalorder %s16, 2
    %p128 = por %p126, %p127
    %p130 = scmp.ne.s32.totalorder %s113, %s129
    %p131 = scmp.eq.s32.totalorder %s16, 0
    %p132 = por %p130, %p131
    %p133 = scmp.le.s32.totalorder 1, %s10
    %p134 = scmp.lt.s32.totalorder %s10, 4
    %p135 = pnand %p133, %p134
    %p136 = pneg %p135
    // Predicated region
    $region9: #{domain_basic_block_forward.2} parent=5 // pred_check
      _
    $region10: #{domain_basic_block_forward.2} parent=5 // pred_check_branch
      %138 = sbr.rel (%p135) target = $region12
    $region11: #{domain_basic_block_forward.2} parent=5 // pred_region
      %s139 = ssub.s32 %s10, 1
      // Predicated region
      $region13: #{domain_basic_block_forward.2} parent=11 // pred_check
        %p140 = pneg %p57
      $region14: #{domain_basic_block_forward.2} parent=11 // pred_check_branch
        %142 = sbr.rel (%p140) target = $region16
      $region15: #{domain_basic_block_forward.2} parent=11 // pred_region
        _
      $region16: #{domain_basic_block_forward.2} parent=11 // pred_fallthru
        _
      // Predicated region
      $region17: #{domain_basic_block_forward.2} parent=11 // pred_check
        %p143 = pneg %p78
      $region18: #{domain_basic_block_forward.2} parent=11 // pred_check_branch
        %145 = sbr.rel (%p143) target = $region20
      $region19: #{domain_basic_block_forward.2} parent=11 // pred_region
        _
      $region20: #{domain_basic_block_forward.2} parent=11 // pred_fallthru
        _
      // Predicated region
      $region21: #{domain_basic_block_forward.2} parent=11 // pred_check
        %p146 = pneg %p99
      $region22: #{domain_basic_block_forward.2} parent=11 // pred_check_branch
        %148 = sbr.rel (%p146) target = $region24
      $region23: #{domain_basic_block_forward.2} parent=11 // pred_region
        _
      $region24: #{domain_basic_block_forward.2} parent=11 // pred_fallthru
        _
    $region12: #{domain_basic_block_forward.2} parent=5 // pred_fallthru
      _
    %p149 = scmp.lt.s32.totalorder %s10, 3
    // Predicated region
    $region25: #{domain_basic_block_forward.2} parent=5 // pred_check
      %p150 = pneg %p149
    $region26: #{domain_basic_block_forward.2} parent=5 // pred_check_branch
      %152 = sbr.rel (%p150) target = $region28
    $region27: #{domain_basic_block_forward.2} parent=5 // pred_region
      // Predicated region
      $region29: #{domain_basic_block_forward.2} parent=27 // pred_check
        %p153 = pneg %p30
      $region30: #{domain_basic_block_forward.2} parent=27 // pred_check_branch
        %155 = sbr.rel (%p153) target = $region32
      $region31: #{domain_basic_block_forward.2} parent=27 // pred_region
        %s156 = smul.u32 16, %s10
        %p157 = scmp.lt.s32.totalorder %s156, 47
        %s158 = scalar_select %p157, %s156, 47
        %s159 = smul.addr %s158, 7
        %s160 = smul.addr %s159, 4
        %s161 = scalar_lea.vmem %s0, %s160
        %s162 = smul.u32 16, %s10
      $region32: #{domain_basic_block_forward.2} parent=27 // pred_fallthru
        _
    $region28: #{domain_basic_block_forward.2} parent=5 // pred_fallthru
      _
    %p163 = scmp.le.s32.totalorder 1, %s10
    %p164 = scmp.lt.s32.totalorder %s10, 4
    %p165 = pnand %p163, %p164
    %p166 = pneg %p165
    // Predicated region
    $region33: #{domain_basic_block_forward.2} parent=5 // pred_check
      _
    $region34: #{domain_basic_block_forward.2} parent=5 // pred_check_branch
      %168 = sbr.rel (%p165) target = $region36
    $region35: #{domain_basic_block_forward.2} parent=5 // pred_region
      %s169 = ssub.s32 %s10, 1
      %s170 = smul.u32 16, %s15
      %p171 = scmp.lt.s32.totalorder %s170, 47
      %s172 = scalar_select %p171, %s170, 47
      %s173 = smul.addr %s172, 7
      %s174 = smul.addr %s173, 4
      %s175 = scalar_lea.vmem %s0, %s174
      %p176 = pneg %p36
      %p177 = pneg %p33
      %p178 = pneg %p57
      %p179 = pneg %p54
      %p180 = pneg %p78
      %p181 = pneg %p75
      %p182 = pneg %p99
      %p183 = pneg %p96
      %p184 = pneg %p125
      %p185 = pneg %p122
      %s186 = smul.u32 16, %s15
      %p187 = scmp.lt.s32.totalorder %s186, 47
      %s188 = scalar_select %p187, %s186, 47
      %s189 = smul.addr %s188, 8
      %s190 = scalar_lea.vmem %s4, %s189
      %s191 = smul.u32 16, %s15
      %p192 = scmp.lt.s32.totalorder %s191, 47
      %s193 = scalar_select %p192, %s191, 47
      %s194 = smul.addr %s193, 7
      %s195 = smul.addr %s194, 4
      %s196 = scalar_lea.vmem %s0, %s195
      %s197 = smul.u32 16, %s15
      %s198 = smul.u32 16, %s15
      %p199 = scmp.lt.s32.totalorder %s198, 47
      %s200 = scalar_select %p199, %s198, 47
      %s201 = smul.addr %s200, 8
      %s202 = scalar_lea.vmem %s4, %s201
      %s203 = smul.u32 16, %s15
      %v205 = vld [vmem:[%s196] sm:$0xff]
      %v206 = vld [vmem:[%s196 + $0x8] sm:$0xff]
      %v207 = vld [vmem:[%s196 + $0x10] sm:$0xff]
      %v208 = vld [vmem:[%s196 + $0x18] sm:$0xf]
      %v209 = vld [vmem:[%s196 + $0x1c] sm:$0xff]
      %v210 = vld [vmem:[%s196 + $0x24] sm:$0xff]
      %v211 = vld [vmem:[%s196 + $0x2c] sm:$0xff]
      %v212 = vld [vmem:[%s196 + $0x34] sm:$0xf]
      %v213 = vld [vmem:[%s196 + $0x38] sm:$0xff]
      %v214 = vld [vmem:[%s196 + $0x40] sm:$0xff]
      %v215 = vld [vmem:[%s196 + $0x48] sm:$0xff]
      %v216 = vld [vmem:[%s196 + $0x50] sm:$0xf]
      %v217 = vld [vmem:[%s196 + $0x54] sm:$0xff]
      %v218 = vld [vmem:[%s196 + $0x5c] sm:$0xff]
      %v219 = vld [vmem:[%s196 + $0x64] sm:$0xff]
      %v220 = vld [vmem:[%s196 + $0x6c] sm:$0xf]
      %v221 = vld [vmem:[%s196 + $0x70] sm:$0xff]
      %v222 = vld [vmem:[%s196 + $0x78] sm:$0xff]
      %v223 = vld [vmem:[%s196 + $0x80] sm:$0xff]
      %v224 = vld [vmem:[%s196 + $0x88] sm:$0xf]
      %v225 = vld [vmem:[%s196 + $0x8c] sm:$0xff]
      %v226 = vld [vmem:[%s196 + $0x94] sm:$0xff]
      %v227 = vld [vmem:[%s196 + $0x9c] sm:$0xff]
      %v228 = vld [vmem:[%s196 + $0xa4] sm:$0xf]
      %v229 = vld [vmem:[%s196 + $0xa8] sm:$0xff]
      %v230 = vld [vmem:[%s196 + $0xb0] sm:$0xff]
      %v231 = vld [vmem:[%s196 + $0xb8] sm:$0xff]
      %v232 = vld [vmem:[%s196 + $0xc0] sm:$0xf]
      %v233 = vld [vmem:[%s196 + $0xc4] sm:$0xff]
      %v234 = vld [vmem:[%s196 + $0xcc] sm:$0xff]
      %v235 = vld [vmem:[%s196 + $0xd4] sm:$0xff]
      %v236 = vld [vmem:[%s196 + $0xdc] sm:$0xf]
      %v237 = vld [vmem:[%s196 + $0xe0] sm:$0xff]
      %v238 = vld [vmem:[%s196 + $0xe8] sm:$0xff]
      %v239 = vld [vmem:[%s196 + $0xf0] sm:$0xff]
      %v240 = vld [vmem:[%s196 + $0xf8] sm:$0xf]
      %v241 = vld [vmem:[%s196 + $0xfc] sm:$0xff]
      %v242 = vld [vmem:[%s196 + $0x104] sm:$0xff]
      %v243 = vld [vmem:[%s196 + $0x10c] sm:$0xff]
      %v244 = vld [vmem:[%s196 + $0x114] sm:$0xf]
      %v245 = vld [vmem:[%s196 + $0x118] sm:$0xff]
      %v246 = vld [vmem:[%s196 + $0x120] sm:$0xff]
      %v247 = vld [vmem:[%s196 + $0x128] sm:$0xff]
      %v248 = vld [vmem:[%s196 + $0x130] sm:$0xf]
      %v249 = vld [vmem:[%s196 + $0x134] sm:$0xff]
      %v250 = vld [vmem:[%s196 + $0x13c] sm:$0xff]
      %v251 = vld [vmem:[%s196 + $0x144] sm:$0xff]
      %v252 = vld [vmem:[%s196 + $0x14c] sm:$0xf]
      %v253 = vld [vmem:[%s196 + $0x150] sm:$0xff]
      %v254 = vld [vmem:[%s196 + $0x158] sm:$0xff]
      %v255 = vld [vmem:[%s196 + $0x160] sm:$0xff]
      %v256 = vld [vmem:[%s196 + $0x168] sm:$0xf]
      %v257 = vld [vmem:[%s196 + $0x16c] sm:$0xff]
      %v258 = vld [vmem:[%s196 + $0x174] sm:$0xff]
      %v259 = vld [vmem:[%s196 + $0x17c] sm:$0xff]
      %v260 = vld [vmem:[%s196 + $0x184] sm:$0xf]
      %v261 = vld [vmem:[%s196 + $0x188] sm:$0xff]
      %v262 = vld [vmem:[%s196 + $0x190] sm:$0xff]
      %v263 = vld [vmem:[%s196 + $0x198] sm:$0xff]
      %v264 = vld [vmem:[%s196 + $0x1a0] sm:$0xf]
      %v265 = vld [vmem:[%s196 + $0x1a4] sm:$0xff]
      %v266 = vld [vmem:[%s196 + $0x1ac] sm:$0xff]
      %v267 = vld [vmem:[%s196 + $0x1b4] sm:$0xff]
      %v268 = vld [vmem:[%s196 + $0x1bc] sm:$0xf]
      %v269 = vld [vmem:[%s1] sm:$0xf]
      %v270 = vld [vmem:[%s1 + $0x4] sm:$0xf]
      %v271 = vld [vmem:[%s1 + $0x8] sm:$0xf]
      %v272 = vld [vmem:[%s1 + $0xc] sm:$0xf]
      %v273 = vld [vmem:[%s1 + $0x10] sm:$0xf]
      %v274 = vld [vmem:[%s1 + $0x14] sm:$0xf]
      %v275 = vld [vmem:[%s1 + $0x18] sm:$0xf]
      %v276 = vld [vmem:[%s1 + $0x1c] sm:$0xf]
      %v277 = vld [vmem:[%s1 + $0x20] sm:$0xf]
      %v278 = vld [vmem:[%s1 + $0x24] sm:$0xf]
      %v279 = vld [vmem:[%s1 + $0x28] sm:$0xf]
      %v280 = vld [vmem:[%s1 + $0x2c] sm:$0xf]
      %v281 = vld [vmem:[%s1 + $0x30] sm:$0xf]
      %v282 = vld [vmem:[%s1 + $0x34] sm:$0xf]
      %v283 = vld [vmem:[%s1 + $0x38] sm:$0xf]
      %v284 = vld [vmem:[%s1 + $0x3c] sm:$0xf]
      %v285 = vld [vmem:[%s1 + $0x40] sm:$0xf]
      %v286 = vld [vmem:[%s1 + $0x44] sm:$0xf]
      %v287 = vld [vmem:[%s1 + $0x48] sm:$0xf]
      %v288 = vld [vmem:[%s1 + $0x4c] sm:$0xf]
      %v289 = vld [vmem:[%s1 + $0x50] sm:$0xf]
      %v290 = vld [vmem:[%s1 + $0x54] sm:$0xf]
      %v291 = vld [vmem:[%s1 + $0x58] sm:$0xf]
      %v292 = vld [vmem:[%s1 + $0x5c] sm:$0xf]
      %v293 = vld [vmem:[%s1 + $0x60] sm:$0xf]
      %v294 = vld [vmem:[%s1 + $0x64] sm:$0xf]
      %v295 = vld [vmem:[%s1 + $0x68] sm:$0xf]
      %v296 = vld [vmem:[%s1 + $0x6c] sm:$0xf]
      %v297 = vld [vmem:[%s1 + $0x70] sm:$0xf]
      %v298 = vld [vmem:[%s1 + $0x74] sm:$0xf]
      %v299 = vld [vmem:[%s1 + $0x78] sm:$0xf]
      %v300 = vld [vmem:[%s1 + $0x7c] sm:$0xf]
      %v301 = vld [vmem:[%s1 + $0x80] sm:$0xf]
      %v302 = vld [vmem:[%s1 + $0x84] sm:$0xf]
      %v303 = vld [vmem:[%s1 + $0x88] sm:$0xf]
      %v304 = vld [vmem:[%s1 + $0x8c] sm:$0xf]
      %v305 = vld [vmem:[%s1 + $0x90] sm:$0xf]
      %v306 = vld [vmem:[%s1 + $0x94] sm:$0xf]
      %v307 = vld [vmem:[%s1 + $0x98] sm:$0xf]
      %v308 = vld [vmem:[%s1 + $0x9c] sm:$0xf]
      %v309 = vld [vmem:[%s1 + $0xa0] sm:$0xf]
      %v310 = vld [vmem:[%s1 + $0xa4] sm:$0xf]
      %v311 = vld [vmem:[%s1 + $0xa8] sm:$0xf]
      %v312 = vld [vmem:[%s1 + $0xac] sm:$0xf]
      %v313 = vld [vmem:[%s1 + $0xb0] sm:$0xf]
      %v314 = vld [vmem:[%s1 + $0xb4] sm:$0xf]
      %v315 = vld [vmem:[%s1 + $0xb8] sm:$0xf]
      %v316 = vld [vmem:[%s1 + $0xbc] sm:$0xf]
      %v317 = vld [vmem:[%s1 + $0xc0] sm:$0xf]
      %v318 = vld [vmem:[%s1 + $0xc4] sm:$0xf]
      %v319 = vld [vmem:[%s1 + $0xc8] sm:$0xf]
      %v320 = vld [vmem:[%s1 + $0xcc] sm:$0xf]
      %v321 = vld [vmem:[%s1 + $0xd0] sm:$0xf]
      %v322 = vld [vmem:[%s1 + $0xd4] sm:$0xf]
      %v323 = vld [vmem:[%s1 + $0xd8] sm:$0xf]
      %v324 = vld [vmem:[%s1 + $0xdc] sm:$0xf]
      %v325 = vld [vmem:[%s1 + $0xe0] sm:$0xf]
      %v326 = vld [vmem:[%s1 + $0xe4] sm:$0xf]
      %v327 = vld [vmem:[%s1 + $0xe8] sm:$0xf]
      %v328 = vld [vmem:[%s1 + $0xec] sm:$0xf]
      %v329 = vld [vmem:[%s1 + $0xf0] sm:$0xf]
      %v330 = vld [vmem:[%s1 + $0xf4] sm:$0xf]
      %v331 = vld [vmem:[%s1 + $0xf8] sm:$0xf]
      %v332 = vld [vmem:[%s1 + $0xfc] sm:$0xf]
      %v333 = vld [vmem:[%s1 + $0x100] sm:$0xf]
      %v334 = vld [vmem:[%s1 + $0x104] sm:$0xf]
      %v335 = vld [vmem:[%s1 + $0x108] sm:$0xf]
      %v336 = vld [vmem:[%s1 + $0x10c] sm:$0xf]
      %v337 = vld [vmem:[%s1 + $0x110] sm:$0xf]
      %v338 = vld [vmem:[%s1 + $0x114] sm:$0xf]
      %v339 = vld [vmem:[%s1 + $0x118] sm:$0xf]
      %v340 = vld [vmem:[%s1 + $0x11c] sm:$0xf]
      %v341 = vld [vmem:[%s1 + $0x120] sm:$0xf]
      %v342 = vld [vmem:[%s1 + $0x124] sm:$0xf]
      %v343 = vld [vmem:[%s1 + $0x128] sm:$0xf]
      %v344 = vld [vmem:[%s1 + $0x12c] sm:$0xf]
      %v345 = vld [vmem:[%s1 + $0x130] sm:$0xf]
      %v346 = vld [vmem:[%s1 + $0x134] sm:$0xf]
      %v347 = vld [vmem:[%s1 + $0x138] sm:$0xf]
      %v348 = vld [vmem:[%s1 + $0x13c] sm:$0xf]
      %v349 = vld [vmem:[%s1 + $0x140] sm:$0xf]
      %v350 = vld [vmem:[%s1 + $0x144] sm:$0xf]
      %v351 = vld [vmem:[%s1 + $0x148] sm:$0xf]
      %v352 = vld [vmem:[%s1 + $0x14c] sm:$0xf]
      %v353 = vld [vmem:[%s1 + $0x150] sm:$0xf]
      %v354 = vld [vmem:[%s1 + $0x154] sm:$0xf]
      %v355 = vld [vmem:[%s1 + $0x158] sm:$0xf]
      %v356 = vld [vmem:[%s1 + $0x15c] sm:$0xf]
      %v357 = vld [vmem:[%s1 + $0x160] sm:$0xf]
      %v358 = vld [vmem:[%s1 + $0x164] sm:$0xf]
      %v359 = vld [vmem:[%s1 + $0x168] sm:$0xf]
      %v360 = vld [vmem:[%s1 + $0x16c] sm:$0xf]
      %v361 = vld [vmem:[%s1 + $0x170] sm:$0xf]
      %v362 = vld [vmem:[%s1 + $0x174] sm:$0xf]
      %v363 = vld [vmem:[%s1 + $0x178] sm:$0xf]
      %v364 = vld [vmem:[%s1 + $0x17c] sm:$0xf]
      %v365 = vld [vmem:[%s1 + $0x180] sm:$0xf]
      %v366 = vld [vmem:[%s1 + $0x184] sm:$0xf]
      %v367 = vld [vmem:[%s1 + $0x188] sm:$0xf]
      %v368 = vld [vmem:[%s1 + $0x18c] sm:$0xf]
      %v369 = vld [vmem:[%s1 + $0x190] sm:$0xf]
      %v370 = vld [vmem:[%s1 + $0x194] sm:$0xf]
      %v371 = vld [vmem:[%s1 + $0x198] sm:$0xf]
      %v372 = vld [vmem:[%s1 + $0x19c] sm:$0xf]
      %v373 = vld [vmem:[%s1 + $0x1a0] sm:$0xf]
      %v374 = vld [vmem:[%s1 + $0x1a4] sm:$0xf]
      %v375 = vld [vmem:[%s1 + $0x1a8] sm:$0xf]
      %v376 = vld [vmem:[%s1 + $0x1ac] sm:$0xf]
      %v441 = vunpack.c.l.b16 %v205
      %v442 = vunpack.c.h.b16 %v205
      %v443 = vunpack.c.l.b16 %v206
      %v444 = vunpack.c.h.b16 %v206
      %v445 = vunpack.c.l.b16 %v207
      %v446 = vunpack.c.h.b16 %v207
      %v447 = vunpack.c.l.b16 %v208
      %v448 = vunpack.c.l.b16 %v209
      %v449 = vunpack.c.h.b16 %v209
      %v450 = vunpack.c.l.b16 %v210
      %v451 = vunpack.c.h.b16 %v210
      %v452 = vunpack.c.l.b16 %v211
      %v453 = vunpack.c.h.b16 %v211
      %v454 = vunpack.c.l.b16 %v212
      %v455 = vunpack.c.l.b16 %v213
      %v456 = vunpack.c.h.b16 %v213
      %v457 = vunpack.c.l.b16 %v214
      %v458 = vunpack.c.h.b16 %v214
      %v459 = vunpack.c.l.b16 %v215
      %v460 = vunpack.c.h.b16 %v215
      %v461 = vunpack.c.l.b16 %v216
      %v462 = vunpack.c.l.b16 %v217
      %v463 = vunpack.c.h.b16 %v217
      %v464 = vunpack.c.l.b16 %v218
      %v465 = vunpack.c.h.b16 %v218
      %v466 = vunpack.c.l.b16 %v219
      %v467 = vunpack.c.h.b16 %v219
      %v468 = vunpack.c.l.b16 %v220
      %v469 = vunpack.c.l.b16 %v221
      %v470 = vunpack.c.h.b16 %v221
      %v471 = vunpack.c.l.b16 %v222
      %v472 = vunpack.c.h.b16 %v222
      %v473 = vunpack.c.l.b16 %v223
      %v474 = vunpack.c.h.b16 %v223
      %v475 = vunpack.c.l.b16 %v224
      %v476 = vunpack.c.l.b16 %v225
      %v477 = vunpack.c.h.b16 %v225
      %v478 = vunpack.c.l.b16 %v226
      %v479 = vunpack.c.h.b16 %v226
      %v480 = vunpack.c.l.b16 %v227
      %v481 = vunpack.c.h.b16 %v227
      %v482 = vunpack.c.l.b16 %v228
      %v483 = vunpack.c.l.b16 %v229
      %v484 = vunpack.c.h.b16 %v229
      %v485 = vunpack.c.l.b16 %v230
      %v486 = vunpack.c.h.b16 %v230
      %v487 = vunpack.c.l.b16 %v231
      %v488 = vunpack.c.h.b16 %v231
      %v489 = vunpack.c.l.b16 %v232
      %v490 = vunpack.c.l.b16 %v233
      %v491 = vunpack.c.h.b16 %v233
      %v492 = vunpack.c.l.b16 %v234
      %v493 = vunpack.c.h.b16 %v234
      %v494 = vunpack.c.l.b16 %v235
      %v495 = vunpack.c.h.b16 %v235
      %v496 = vunpack.c.l.b16 %v236
      %v497 = vunpack.c.l.b16 %v237
      %v498 = vunpack.c.h.b16 %v237
      %v499 = vunpack.c.l.b16 %v238
      %v500 = vunpack.c.h.b16 %v238
      %v501 = vunpack.c.l.b16 %v239
      %v502 = vunpack.c.h.b16 %v239
      %v503 = vunpack.c.l.b16 %v240
      %v504 = vunpack.c.l.b16 %v241
      %v505 = vunpack.c.h.b16 %v241
      %v506 = vunpack.c.l.b16 %v242
      %v507 = vunpack.c.h.b16 %v242
      %v508 = vunpack.c.l.b16 %v243
      %v509 = vunpack.c.h.b16 %v243
      %v510 = vunpack.c.l.b16 %v244
      %v511 = vunpack.c.l.b16 %v245
      %v512 = vunpack.c.h.b16 %v245
      %v513 = vunpack.c.l.b16 %v246
      %v514 = vunpack.c.h.b16 %v246
      %v515 = vunpack.c.l.b16 %v247
      %v516 = vunpack.c.h.b16 %v247
      %v517 = vunpack.c.l.b16 %v248
      %v518 = vunpack.c.l.b16 %v249
      %v519 = vunpack.c.h.b16 %v249
      %v520 = vunpack.c.l.b16 %v250
      %v521 = vunpack.c.h.b16 %v250
      %v522 = vunpack.c.l.b16 %v251
      %v523 = vunpack.c.h.b16 %v251
      %v524 = vunpack.c.l.b16 %v252
      %v525 = vunpack.c.l.b16 %v253
      %v526 = vunpack.c.h.b16 %v253
      %v527 = vunpack.c.l.b16 %v254
      %v528 = vunpack.c.h.b16 %v254
      %v529 = vunpack.c.l.b16 %v255
      %v530 = vunpack.c.h.b16 %v255
      %v531 = vunpack.c.l.b16 %v256
      %v532 = vunpack.c.l.b16 %v257
      %v533 = vunpack.c.h.b16 %v257
      %v534 = vunpack.c.l.b16 %v258
      %v535 = vunpack.c.h.b16 %v258
      %v536 = vunpack.c.l.b16 %v259
      %v537 = vunpack.c.h.b16 %v259
      %v538 = vunpack.c.l.b16 %v260
      %v539 = vunpack.c.l.b16 %v261
      %v540 = vunpack.c.h.b16 %v261
      %v541 = vunpack.c.l.b16 %v262
      %v542 = vunpack.c.h.b16 %v262
      %v543 = vunpack.c.l.b16 %v263
      %v544 = vunpack.c.h.b16 %v263
      %v545 = vunpack.c.l.b16 %v264
      %v546 = vunpack.c.l.b16 %v265
      %v547 = vunpack.c.h.b16 %v265
      %v548 = vunpack.c.l.b16 %v266
      %v549 = vunpack.c.h.b16 %v266
      %v550 = vunpack.c.l.b16 %v267
      %v551 = vunpack.c.h.b16 %v267
      %v552 = vunpack.c.l.b16 %v268
      %v553 = vpack.c.b16 %v448, %v441
      %v554 = vpack.c.b16 %v449, %v442
      %v555 = vpack.c.b16 %v450, %v443
      %v556 = vpack.c.b16 %v451, %v444
      %v557 = vpack.c.b16 %v452, %v445
      %v558 = vpack.c.b16 %v453, %v446
      %v559 = vpack.c.b16 %v454, %v447
      %v560 = vpack.c.b16 %v462, %v455
      %v561 = vpack.c.b16 %v463, %v456
      %v562 = vpack.c.b16 %v464, %v457
      %v563 = vpack.c.b16 %v465, %v458
      %v564 = vpack.c.b16 %v466, %v459
      %v565 = vpack.c.b16 %v467, %v460
      %v566 = vpack.c.b16 %v468, %v461
      %v567 = vpack.c.b16 %v476, %v469
      %v568 = vpack.c.b16 %v477, %v470
      %v569 = vpack.c.b16 %v478, %v471
      %v570 = vpack.c.b16 %v479, %v472
      %v571 = vpack.c.b16 %v480, %v473
      %v572 = vpack.c.b16 %v481, %v474
      %v573 = vpack.c.b16 %v482, %v475
      %v574 = vpack.c.b16 %v490, %v483
      %v575 = vpack.c.b16 %v491, %v484
      %v576 = vpack.c.b16 %v492, %v485
      %v577 = vpack.c.b16 %v493, %v486
      %v578 = vpack.c.b16 %v494, %v487
      %v579 = vpack.c.b16 %v495, %v488
      %v580 = vpack.c.b16 %v496, %v489
      %v581 = vpack.c.b16 %v504, %v497
      %v582 = vpack.c.b16 %v505, %v498
      %v583 = vpack.c.b16 %v506, %v499
      %v584 = vpack.c.b16 %v507, %v500
      %v585 = vpack.c.b16 %v508, %v501
      %v586 = vpack.c.b16 %v509, %v502
      %v587 = vpack.c.b16 %v510, %v503
      %v588 = vpack.c.b16 %v518, %v511
      %v589 = vpack.c.b16 %v519, %v512
      %v590 = vpack.c.b16 %v520, %v513
      %v591 = vpack.c.b16 %v521, %v514
      %v592 = vpack.c.b16 %v522, %v515
      %v593 = vpack.c.b16 %v523, %v516
      %v594 = vpack.c.b16 %v524, %v517
      %v595 = vpack.c.b16 %v532, %v525
      %v596 = vpack.c.b16 %v533, %v526
      %v597 = vpack.c.b16 %v534, %v527
      %v598 = vpack.c.b16 %v535, %v528
      %v599 = vpack.c.b16 %v536, %v529
      %v600 = vpack.c.b16 %v537, %v530
      %v601 = vpack.c.b16 %v538, %v531
      %v602 = vpack.c.b16 %v546, %v539
      %v603 = vpack.c.b16 %v547, %v540
      %v604 = vpack.c.b16 %v548, %v541
      %v605 = vpack.c.b16 %v549, %v542
      %v606 = vpack.c.b16 %v550, %v543
      %v607 = vpack.c.b16 %v551, %v544
      %v608 = vpack.c.b16 %v552, %v545
      %v765 = vunpack.c.l.b16 %v269
      %v766 = vunpack.c.l.b16 %v270
      %v767 = vunpack.c.l.b16 %v271
      %v768 = vunpack.c.l.b16 %v272
      %v769 = vunpack.c.l.b16 %v273
      %v770 = vunpack.c.l.b16 %v274
      %v771 = vunpack.c.l.b16 %v275
      %v772 = vunpack.c.l.b16 %v276
      %v773 = vunpack.c.l.b16 %v277
      %v774 = vunpack.c.l.b16 %v278
      %v775 = vunpack.c.l.b16 %v279
      %v776 = vunpack.c.l.b16 %v280
      %v777 = vunpack.c.l.b16 %v281
      %v778 = vunpack.c.l.b16 %v282
      %v779 = vunpack.c.l.b16 %v283
      %v780 = vunpack.c.l.b16 %v284
      %v781 = vunpack.c.l.b16 %v285
      %v782 = vunpack.c.l.b16 %v286
      %v783 = vunpack.c.l.b16 %v287
      %v784 = vunpack.c.l.b16 %v288
      %v785 = vunpack.c.l.b16 %v289
      %v786 = vunpack.c.l.b16 %v290
      %v787 = vunpack.c.l.b16 %v291
      %v788 = vunpack.c.l.b16 %v292
      %v789 = vunpack.c.l.b16 %v293
      %v790 = vunpack.c.l.b16 %v294
      %v791 = vunpack.c.l.b16 %v295
      %v792 = vunpack.c.l.b16 %v296
      %v793 = vunpack.c.l.b16 %v297
      %v794 = vunpack.c.l.b16 %v298
      %v795 = vunpack.c.l.b16 %v299
      %v796 = vunpack.c.l.b16 %v300
      %v797 = vunpack.c.l.b16 %v301
      %v798 = vunpack.c.l.b16 %v302
      %v799 = vunpack.c.l.b16 %v303
      %v800 = vunpack.c.l.b16 %v304
      %v801 = vunpack.c.l.b16 %v305
      %v802 = vunpack.c.l.b16 %v306
      %v803 = vunpack.c.l.b16 %v307
      %v804 = vunpack.c.l.b16 %v308
      %v805 = vunpack.c.l.b16 %v309
      %v806 = vunpack.c.l.b16 %v310
      %v807 = vunpack.c.l.b16 %v311
      %v808 = vunpack.c.l.b16 %v312
      %v809 = vunpack.c.l.b16 %v313
      %v810 = vunpack.c.l.b16 %v314
      %v811 = vunpack.c.l.b16 %v315
      %v812 = vunpack.c.l.b16 %v316
      %v813 = vunpack.c.l.b16 %v317
      %v814 = vunpack.c.l.b16 %v318
      %v815 = vunpack.c.l.b16 %v319
      %v816 = vunpack.c.l.b16 %v320
      %v817 = vunpack.c.l.b16 %v321
      %v818 = vunpack.c.l.b16 %v322
      %v819 = vunpack.c.l.b16 %v323
      %v820 = vunpack.c.l.b16 %v324
      %v821 = vunpack.c.l.b16 %v325
      %v822 = vunpack.c.l.b16 %v326
      %v823 = vunpack.c.l.b16 %v327
      %v824 = vunpack.c.l.b16 %v328
      %v825 = vunpack.c.l.b16 %v329
      %v826 = vunpack.c.l.b16 %v330
      %v827 = vunpack.c.l.b16 %v331
      %v828 = vunpack.c.l.b16 %v332
      %v829 = vunpack.c.l.b16 %v333
      %v830 = vunpack.c.l.b16 %v334
      %v831 = vunpack.c.l.b16 %v335
      %v832 = vunpack.c.l.b16 %v336
      %v833 = vunpack.c.l.b16 %v337
      %v834 = vunpack.c.l.b16 %v338
      %v835 = vunpack.c.l.b16 %v339
      %v836 = vunpack.c.l.b16 %v340
      %v837 = vunpack.c.l.b16 %v341
      %v838 = vunpack.c.l.b16 %v342
      %v839 = vunpack.c.l.b16 %v343
      %v840 = vunpack.c.l.b16 %v344
      %v841 = vunpack.c.l.b16 %v345
      %v842 = vunpack.c.l.b16 %v346
      %v843 = vunpack.c.l.b16 %v347
      %v844 = vunpack.c.l.b16 %v348
      %v845 = vunpack.c.l.b16 %v349
      %v846 = vunpack.c.l.b16 %v350
      %v847 = vunpack.c.l.b16 %v351
      %v848 = vunpack.c.l.b16 %v352
      %v849 = vunpack.c.l.b16 %v353
      %v850 = vunpack.c.l.b16 %v354
      %v851 = vunpack.c.l.b16 %v355
      %v852 = vunpack.c.l.b16 %v356
      %v853 = vunpack.c.l.b16 %v357
      %v854 = vunpack.c.l.b16 %v358
      %v855 = vunpack.c.l.b16 %v359
      %v856 = vunpack.c.l.b16 %v360
      %v857 = vunpack.c.l.b16 %v361
      %v858 = vunpack.c.l.b16 %v362
      %v859 = vunpack.c.l.b16 %v363
      %v860 = vunpack.c.l.b16 %v364
      %v861 = vunpack.c.l.b16 %v365
      %v862 = vunpack.c.l.b16 %v366
      %v863 = vunpack.c.l.b16 %v367
      %v864 = vunpack.c.l.b16 %v368
      %v865 = vunpack.c.l.b16 %v369
      %v866 = vunpack.c.l.b16 %v370
      %v867 = vunpack.c.l.b16 %v371
      %v868 = vunpack.c.l.b16 %v372
      %v869 = vunpack.c.l.b16 %v373
      %v870 = vunpack.c.l.b16 %v374
      %v871 = vunpack.c.l.b16 %v375
      %v872 = vunpack.c.l.b16 %v376
      %v873 = vpack.c.b16 %v766, %v765
      %v874 = vpack.c.b16 %v768, %v767
      %v875 = vpack.c.b16 %v770, %v769
      %v876 = vpack.c.b16 %v772, %v771
      %v877 = vpack.c.b16 %v774, %v773
      %v878 = vpack.c.b16 %v776, %v775
      %v879 = vpack.c.b16 %v778, %v777
      %v880 = vpack.c.b16 %v780, %v779
      %v881 = vpack.c.b16 %v782, %v781
      %v882 = vpack.c.b16 %v784, %v783
      %v883 = vpack.c.b16 %v786, %v785
      %v884 = vpack.c.b16 %v788, %v787
      %v885 = vpack.c.b16 %v790, %v789
      %v886 = vpack.c.b16 %v792, %v791
      %v887 = vpack.c.b16 %v794, %v793
      %v888 = vpack.c.b16 %v796, %v795
      %v889 = vpack.c.b16 %v798, %v797
      %v890 = vpack.c.b16 %v800, %v799
      %v891 = vpack.c.b16 %v802, %v801
      %v892 = vpack.c.b16 %v804, %v803
      %v893 = vpack.c.b16 %v806, %v805
      %v894 = vpack.c.b16 %v808, %v807
      %v895 = vpack.c.b16 %v810, %v809
      %v896 = vpack.c.b16 %v812, %v811
      %v897 = vpack.c.b16 %v814, %v813
      %v898 = vpack.c.b16 %v816, %v815
      %v899 = vpack.c.b16 %v818, %v817
      %v900 = vpack.c.b16 %v820, %v819
      %v901 = vpack.c.b16 %v822, %v821
      %v902 = vpack.c.b16 %v824, %v823
      %v903 = vpack.c.b16 %v826, %v825
      %v904 = vpack.c.b16 %v828, %v827
      %v905 = vpack.c.b16 %v830, %v829
      %v906 = vpack.c.b16 %v832, %v831
      %v907 = vpack.c.b16 %v834, %v833
      %v908 = vpack.c.b16 %v836, %v835
      %v909 = vpack.c.b16 %v838, %v837
      %v910 = vpack.c.b16 %v840, %v839
      %v911 = vpack.c.b16 %v842, %v841
      %v912 = vpack.c.b16 %v844, %v843
      %v913 = vpack.c.b16 %v846, %v845
      %v914 = vpack.c.b16 %v848, %v847
      %v915 = vpack.c.b16 %v850, %v849
      %v916 = vpack.c.b16 %v852, %v851
      %v917 = vpack.c.b16 %v854, %v853
      %v918 = vpack.c.b16 %v856, %v855
      %v919 = vpack.c.b16 %v858, %v857
      %v920 = vpack.c.b16 %v860, %v859
      %v921 = vpack.c.b16 %v862, %v861
      %v922 = vpack.c.b16 %v864, %v863
      %v923 = vpack.c.b16 %v866, %v865
      %v924 = vpack.c.b16 %v868, %v867
      %v925 = vpack.c.b16 %v870, %v869
      %v926 = vpack.c.b16 %v872, %v871
      %vm981 = vcmask 785408
      %v983 = vsel %vm981, %v559, 0
      %v986 = vsel %vm981, %v566, 0
      %v989 = vsel %vm981, %v573, 0
      %v992 = vsel %vm981, %v580, 0
      %v995 = vsel %vm981, %v587, 0
      %v998 = vsel %vm981, %v594, 0
      %v1001 = vsel %vm981, %v601, 0
      %v1004 = vsel %vm981, %v608, 0
      %1006 = vmatprep.subr.bf16.mxu0 0
      %1007 = vmatpush1.bf16.msra.mxu0 %v873
      %1008 = vmatprep.subr.bf16.mxu0 0
      %1009 = vmatpush1.bf16.msra.mxu0 %v874
      %1010 = vmatprep.subr.bf16.mxu0 0
      %1011 = vmatpush1.bf16.msra.mxu0 %v875
      %1012 = vmatprep.subr.bf16.mxu0 0
      %1013 = vmatpush1.bf16.msra.mxu0 %v876
      %1014 = vmatprep.subr.bf16.mxu0 0
      %1015 = vmatpush1.bf16.msra.mxu0 %v877
      %1016 = vmatprep.subr.bf16.mxu0 0
      %1017 = vmatpush1.bf16.msra.mxu0 %v878
      %1018 = vmatprep.subr.bf16.mxu0 0
      %1019 = vmatpush1.bf16.msra.mxu0 %v879
      %1020 = vmatprep.subr.bf16.mxu0 0
      %1021 = vmatpush1.bf16.msra.mxu0 %v880
      %1022 = vmatprep.subr.bf16.mxu0 0
      %1023 = vmatpush1.bf16.msra.mxu0 %v881
      %1024 = vmatprep.subr.bf16.mxu0 0
      %1025 = vmatpush1.bf16.msra.mxu0 %v882
      %1026 = vmatprep.subr.bf16.mxu0 0
      %1027 = vmatpush1.bf16.msra.mxu0 %v883
      %1028 = vmatprep.subr.bf16.mxu0 0
      %1029 = vmatpush1.bf16.msra.mxu0 %v884
      %1030 = vmatprep.subr.bf16.mxu0 0
      %1031 = vmatpush1.bf16.msra.mxu0 %v885
      %1032 = vmatprep.subr.bf16.mxu0 0
      %1033 = vmatpush1.bf16.msra.mxu0 %v886
      %1034 = vmatprep.subr.bf16.mxu0 0
      %1035 = vmatpush1.bf16.msra.mxu0 %v887
      %1036 = vmatprep.subr.bf16.mxu0 0
      %1037 = vmatpush1.bf16.msra.mxu0 %v888
      %1038 = vmatprep.mubr.bf16.mxu0 %v554
      %1039 = vmatmul.mubr.bf16.gmra.mrb[0].mxu0 %v553
      %v1040 = vpop.f32.mrb[0].mxu0
      %v1041 = vadd.f32 0.0, %v1040
      %v1042 = vpop.f32.mrb[0].mxu0
      %v1043 = vpop.f32.mrb[0].mxu0
      %v1044 = vadd.f32 0.0, %v1043
      %v1045 = vpop.f32.mrb[0].mxu0
      %1046 = vmatprep.mubr.bf16.mxu0 %v561
      %1047 = vmatmul.mubr.bf16.gmra.mrb[0].mxu0 %v560
      %v1048 = vpop.f32.mrb[0].mxu0
      %v1049 = vadd.f32 0.0, %v1048
      %v1050 = vpop.f32.mrb[0].mxu0
      %v1051 = vpop.f32.mrb[0].mxu0
      %v1052 = vadd.f32 0.0, %v1051
      %v1053 = vpop.f32.mrb[0].mxu0
      %1054 = vmatprep.mubr.bf16.mxu0 %v568
      %1055 = vmatmul.mubr.bf16.gmra.mrb[0].mxu0 %v567
      %v1056 = vpop.f32.mrb[0].mxu0
      %v1057 = vadd.f32 0.0, %v1056
      %v1058 = vpop.f32.mrb[0].mxu0
      %v1059 = vpop.f32.mrb[0].mxu0
      %v1060 = vadd.f32 0.0, %v1059
      %v1061 = vpop.f32.mrb[0].mxu0
      %1062 = vmatprep.mubr.bf16.mxu0 %v575
      %1063 = vmatmul.mubr.bf16.gmra.mrb[0].mxu0 %v574
      %v1064 = vpop.f32.mrb[0].mxu0
      %v1065 = vadd.f32 0.0, %v1064
      %v1066 = vpop.f32.mrb[0].mxu0
      %v1067 = vpop.f32.mrb[0].mxu0
      %v1068 = vadd.f32 0.0, %v1067
      %v1069 = vpop.f32.mrb[0].mxu0
      %1070 = vmatprep.mubr.bf16.mxu0 %v582
      %1071 = vmatmul.mubr.bf16.gmra.mrb[0].mxu0 %v581
      %v1072 = vpop.f32.mrb[0].mxu0
      %v1073 = vadd.f32 0.0, %v1072
      %v1074 = vpop.f32.mrb[0].mxu0
      %v1075 = vpop.f32.mrb[0].mxu0
      %v1076 = vadd.f32 0.0, %v1075
      %v1077 = vpop.f32.mrb[0].mxu0
      %1078 = vmatprep.mubr.bf16.mxu0 %v589
      %1079 = vmatmul.mubr.bf16.gmra.mrb[0].mxu0 %v588
      %v1080 = vpop.f32.mrb[0].mxu0
      %v1081 = vadd.f32 0.0, %v1080
      %v1082 = vpop.f32.mrb[0].mxu0
      %v1083 = vpop.f32.mrb[0].mxu0
      %v1084 = vadd.f32 0.0, %v1083
      %v1085 = vpop.f32.mrb[0].mxu0
      %1086 = vmatprep.mubr.bf16.mxu0 %v596
      %1087 = vmatmul.mubr.bf16.gmra.mrb[0].mxu0 %v595
      %v1088 = vpop.f32.mrb[0].mxu0
      %v1089 = vadd.f32 0.0, %v1088
      %v1090 = vpop.f32.mrb[0].mxu0
      %v1091 = vpop.f32.mrb[0].mxu0
      %v1092 = vadd.f32 0.0, %v1091
      %v1093 = vpop.f32.mrb[0].mxu0
      %1094 = vmatprep.mubr.bf16.mxu0 %v603
      %1095 = vmatmul.mubr.bf16.gmra.mrb[0].mxu0 %v602
      %v1096 = vpop.f32.mrb[0].mxu0
      %v1097 = vadd.f32 0.0, %v1096
      %v1098 = vpop.f32.mrb[0].mxu0
      %v1099 = vpop.f32.mrb[0].mxu0
      %v1100 = vadd.f32 0.0, %v1099
      %v1101 = vpop.f32.mrb[0].mxu0
      %1102 = vdwg.mxu0
      %1103 = vmatprep.subr.bf16.mxu0 0
      %1104 = vmatpush1.bf16.msra.mxu0 %v889
      %1105 = vmatprep.subr.bf16.mxu0 0
      %1106 = vmatpush1.bf16.msra.mxu0 %v890
      %1107 = vmatprep.subr.bf16.mxu0 0
      %1108 = vmatpush1.bf16.msra.mxu0 %v891
      %1109 = vmatprep.subr.bf16.mxu0 0
      %1110 = vmatpush1.bf16.msra.mxu0 %v892
      %1111 = vmatprep.subr.bf16.mxu0 0
      %1112 = vmatpush1.bf16.msra.mxu0 %v893
      %1113 = vmatprep.subr.bf16.mxu0 0
      %1114 = vmatpush1.bf16.msra.mxu0 %v894
      %1115 = vmatprep.subr.bf16.mxu0 0
      %1116 = vmatpush1.bf16.msra.mxu0 %v895
      %1117 = vmatprep.subr.bf16.mxu0 0
      %1118 = vmatpush1.bf16.msra.mxu0 %v896
      %1119 = vmatprep.subr.bf16.mxu0 0
      %1120 = vmatpush1.bf16.msra.mxu0 %v897
      %1121 = vmatprep.subr.bf16.mxu0 0
      %1122 = vmatpush1.bf16.msra.mxu0 %v898
      %1123 = vmatprep.subr.bf16.mxu0 0
      %1124 = vmatpush1.bf16.msra.mxu0 %v899
      %1125 = vmatprep.subr.bf16.mxu0 0
      %1126 = vmatpush1.bf16.msra.mxu0 %v900
      %1127 = vmatprep.subr.bf16.mxu0 0
      %1128 = vmatpush1.bf16.msra.mxu0 %v901
      %1129 = vmatprep.subr.bf16.mxu0 0
      %1130 = vmatpush1.bf16.msra.mxu0 %v902
      %1131 = vmatprep.subr.bf16.mxu0 0
      %1132 = vmatpush1.bf16.msra.mxu0 %v903
      %1133 = vmatprep.subr.bf16.mxu0 0
      %1134 = vmatpush1.bf16.msra.mxu0 %v904
      %1135 = vmatprep.mubr.bf16.mxu0 %v556
      %1136 = vmatmul.mubr.bf16.gmra.mrb[0].mxu0 %v555
      %v1137 = vpop.f32.mrb[0].mxu0
      %v1138 = vadd.f32 %v1041, %v1137
      %v1139 = vpop.f32.mrb[0].mxu0
      %v1140 = vpop.f32.mrb[0].mxu0
      %v1141 = vadd.f32 %v1044, %v1140
      %v1142 = vpop.f32.mrb[0].mxu0
      %1143 = vmatprep.mubr.bf16.mxu0 %v563
      %1144 = vmatmul.mubr.bf16.gmra.mrb[0].mxu0 %v562
      %v1145 = vpop.f32.mrb[0].mxu0
      %v1146 = vadd.f32 %v1049, %v1145
      %v1147 = vpop.f32.mrb[0].mxu0
      %v1148 = vpop.f32.mrb[0].mxu0
      %v1149 = vadd.f32 %v1052, %v1148
      %v1150 = vpop.f32.mrb[0].mxu0
      %1151 = vmatprep.mubr.bf16.mxu0 %v570
      %1152 = vmatmul.mubr.bf16.gmra.mrb[0].mxu0 %v569
      %v1153 = vpop.f32.mrb[0].mxu0
      %v1154 = vadd.f32 %v1057, %v1153
      %v1155 = vpop.f32.mrb[0].mxu0
      %v1156 = vpop.f32.mrb[0].mxu0
      %v1157 = vadd.f32 %v1060, %v1156
      %v1158 = vpop.f32.mrb[0].mxu0
      %1159 = vmatprep.mubr.bf16.mxu0 %v577
      %1160 = vmatmul.mubr.bf16.gmra.mrb[0].mxu0 %v576
      %v1161 = vpop.f32.mrb[0].mxu0
      %v1162 = vadd.f32 %v1065, %v1161
      %v1163 = vpop.f32.mrb[0].mxu0
      %v1164 = vpop.f32.mrb[0].mxu0
      %v1165 = vadd.f32 %v1068, %v1164
      %v1166 = vpop.f32.mrb[0].mxu0
      %1167 = vmatprep.mubr.bf16.mxu0 %v584
      %1168 = vmatmul.mubr.bf16.gmra.mrb[0].mxu0 %v583
      %v1169 = vpop.f32.mrb[0].mxu0
      %v1170 = vadd.f32 %v1073, %v1169
      %v1171 = vpop.f32.mrb[0].mxu0
      %v1172 = vpop.f32.mrb[0].mxu0
      %v1173 = vadd.f32 %v1076, %v1172
      %v1174 = vpop.f32.mrb[0].mxu0
      %1175 = vmatprep.mubr.bf16.mxu0 %v591
      %1176 = vmatmul.mubr.bf16.gmra.mrb[0].mxu0 %v590
      %v1177 = vpop.f32.mrb[0].mxu0
      %v1178 = vadd.f32 %v1081, %v1177
      %v1179 = vpop.f32.mrb[0].mxu0
      %v1180 = vpop.f32.mrb[0].mxu0
      %v1181 = vadd.f32 %v1084, %v1180
      %v1182 = vpop.f32.mrb[0].mxu0
      %1183 = vmatprep.mubr.bf16.mxu0 %v598
      %1184 = vmatmul.mubr.bf16.gmra.mrb[0].mxu0 %v597
      %v1185 = vpop.f32.mrb[0].mxu0
      %v1186 = vadd.f32 %v1089, %v1185
      %v1187 = vpop.f32.mrb[0].mxu0
      %v1188 = vpop.f32.mrb[0].mxu0
      %v1189 = vadd.f32 %v1092, %v1188
      %v1190 = vpop.f32.mrb[0].mxu0
      %1191 = vmatprep.mubr.bf16.mxu0 %v605
      %1192 = vmatmul.mubr.bf16.gmra.mrb[0].mxu0 %v604
      %v1193 = vpop.f32.mrb[0].mxu0
      %v1194 = vadd.f32 %v1097, %v1193
      %v1195 = vpop.f32.mrb[0].mxu0
      %v1196 = vpop.f32.mrb[0].mxu0
      %v1197 = vadd.f32 %v1100, %v1196
      %v1198 = vpop.f32.mrb[0].mxu0
      %1199 = vdwg.mxu0
      %1200 = vmatprep.subr.bf16.mxu0 0
      %1201 = vmatpush1.bf16.msra.mxu0 %v905
      %1202 = vmatprep.subr.bf16.mxu0 0
      %1203 = vmatpush1.bf16.msra.mxu0 %v906
      %1204 = vmatprep.subr.bf16.mxu0 0
      %1205 = vmatpush1.bf16.msra.mxu0 %v907
      %1206 = vmatprep.subr.bf16.mxu0 0
      %1207 = vmatpush1.bf16.msra.mxu0 %v908
      %1208 = vmatprep.subr.bf16.mxu0 0
      %1209 = vmatpush1.bf16.msra.mxu0 %v909
      %1210 = vmatprep.subr.bf16.mxu0 0
      %1211 = vmatpush1.bf16.msra.mxu0 %v910
      %1212 = vmatprep.subr.bf16.mxu0 0
      %1213 = vmatpush1.bf16.msra.mxu0 %v911
      %1214 = vmatprep.subr.bf16.mxu0 0
      %1215 = vmatpush1.bf16.msra.mxu0 %v912
      %1216 = vmatprep.subr.bf16.mxu0 0
      %1217 = vmatpush1.bf16.msra.mxu0 %v913
      %1218 = vmatprep.subr.bf16.mxu0 0
      %1219 = vmatpush1.bf16.msra.mxu0 %v914
      %1220 = vmatprep.subr.bf16.mxu0 0
      %1221 = vmatpush1.bf16.msra.mxu0 %v915
      %1222 = vmatprep.subr.bf16.mxu0 0
      %1223 = vmatpush1.bf16.msra.mxu0 %v916
      %1224 = vmatprep.subr.bf16.mxu0 0
      %1225 = vmatpush1.bf16.msra.mxu0 %v917
      %1226 = vmatprep.subr.bf16.mxu0 0
      %1227 = vmatpush1.bf16.msra.mxu0 %v918
      %1228 = vmatprep.subr.bf16.mxu0 0
      %1229 = vmatpush1.bf16.msra.mxu0 %v919
      %1230 = vmatprep.subr.bf16.mxu0 0
      %1231 = vmatpush1.bf16.msra.mxu0 %v920
      %1232 = vmatprep.mubr.bf16.mxu0 %v558
      %1233 = vmatmul.mubr.bf16.gmra.mrb[0].mxu0 %v557
      %v1234 = vpop.f32.mrb[0].mxu0
      %v1235 = vadd.f32 %v1138, %v1234
      %v1236 = vpop.f32.mrb[0].mxu0
      %v1237 = vpop.f32.mrb[0].mxu0
      %v1238 = vadd.f32 %v1141, %v1237
      %v1239 = vpop.f32.mrb[0].mxu0
      %1240 = vmatprep.mubr.bf16.mxu0 %v565
      %1241 = vmatmul.mubr.bf16.gmra.mrb[0].mxu0 %v564
      %v1242 = vpop.f32.mrb[0].mxu0
      %v1243 = vadd.f32 %v1146, %v1242
      %v1244 = vpop.f32.mrb[0].mxu0
      %v1245 = vpop.f32.mrb[0].mxu0
      %v1246 = vadd.f32 %v1149, %v1245
      %v1247 = vpop.f32.mrb[0].mxu0
      %1248 = vmatprep.mubr.bf16.mxu0 %v572
      %1249 = vmatmul.mubr.bf16.gmra.mrb[0].mxu0 %v571
      %v1250 = vpop.f32.mrb[0].mxu0
      %v1251 = vadd.f32 %v1154, %v1250
      %v1252 = vpop.f32.mrb[0].mxu0
      %v1253 = vpop.f32.mrb[0].mxu0
      %v1254 = vadd.f32 %v1157, %v1253
      %v1255 = vpop.f32.mrb[0].mxu0
      %1256 = vmatprep.mubr.bf16.mxu0 %v579
      %1257 = vmatmul.mubr.bf16.gmra.mrb[0].mxu0 %v578
      %v1258 = vpop.f32.mrb[0].mxu0
      %v1259 = vadd.f32 %v1162, %v1258
      %v1260 = vpop.f32.mrb[0].mxu0
      %v1261 = vpop.f32.mrb[0].mxu0
      %v1262 = vadd.f32 %v1165, %v1261
      %v1263 = vpop.f32.mrb[0].mxu0
      %1264 = vmatprep.mubr.bf16.mxu0 %v586
      %1265 = vmatmul.mubr.bf16.gmra.mrb[0].mxu0 %v585
      %v1266 = vpop.f32.mrb[0].mxu0
      %v1267 = vadd.f32 %v1170, %v1266
      %v1268 = vpop.f32.mrb[0].mxu0
      %v1269 = vpop.f32.mrb[0].mxu0
      %v1270 = vadd.f32 %v1173, %v1269
      %v1271 = vpop.f32.mrb[0].mxu0
      %1272 = vmatprep.mubr.bf16.mxu0 %v593
      %1273 = vmatmul.mubr.bf16.gmra.mrb[0].mxu0 %v592
      %v1274 = vpop.f32.mrb[0].mxu0
      %v1275 = vadd.f32 %v1178, %v1274
      %v1276 = vpop.f32.mrb[0].mxu0
      %v1277 = vpop.f32.mrb[0].mxu0
      %v1278 = vadd.f32 %v1181, %v1277
      %v1279 = vpop.f32.mrb[0].mxu0
      %1280 = vmatprep.mubr.bf16.mxu0 %v600
      %1281 = vmatmul.mubr.bf16.gmra.mrb[0].mxu0 %v599
      %v1282 = vpop.f32.mrb[0].mxu0
      %v1283 = vadd.f32 %v1186, %v1282
      %v1284 = vpop.f32.mrb[0].mxu0
      %v1285 = vpop.f32.mrb[0].mxu0
      %v1286 = vadd.f32 %v1189, %v1285
      %v1287 = vpop.f32.mrb[0].mxu0
      %1288 = vmatprep.mubr.bf16.mxu0 %v607
      %1289 = vmatmul.mubr.bf16.gmra.mrb[0].mxu0 %v606
      %v1290 = vpop.f32.mrb[0].mxu0
      %v1291 = vadd.f32 %v1194, %v1290
      %v1292 = vpop.f32.mrb[0].mxu0
      %v1293 = vpop.f32.mrb[0].mxu0
      %v1294 = vadd.f32 %v1197, %v1293
      %v1295 = vpop.f32.mrb[0].mxu0
      %1296 = vdwg.mxu0
      %1297 = vmatprep.subr.bf16.mxu0 0
      %1298 = vmatpush1.bf16.msra.mxu0 %v921
      %1299 = vmatprep.subr.bf16.mxu0 0
      %1300 = vmatpush1.bf16.msra.mxu0 %v922
      %1301 = vmatprep.subr.bf16.mxu0 0
      %1302 = vmatpush1.bf16.msra.mxu0 %v923
      %1303 = vmatprep.subr.bf16.mxu0 0
      %1304 = vmatpush1.bf16.msra.mxu0 %v924
      %1305 = vmatprep.subr.bf16.mxu0 0
      %1306 = vmatpush1.bf16.msra.mxu0 %v925
      %1307 = vmatprep.subr.bf16.mxu0 0
      %1308 = vmatpush1.bf16.msra.mxu0 %v926
      %1309 = vmatprep.subr.bf16.mxu0 0
      %1310 = vmatpush1.bf16.msra.mxu0 0
      %1311 = vmatprep.subr.bf16.mxu0 0
      %1312 = vmatpush1.bf16.msra.mxu0 0
      %1313 = vmatprep.subr.bf16.mxu0 0
      %1314 = vmatpush1.bf16.msra.mxu0 0
      %1315 = vmatprep.subr.bf16.mxu0 0
      %1316 = vmatpush1.bf16.msra.mxu0 0
      %1317 = vmatprep.subr.bf16.mxu0 0
      %1318 = vmatpush1.bf16.msra.mxu0 0
      %1319 = vmatprep.subr.bf16.mxu0 0
      %1320 = vmatpush1.bf16.msra.mxu0 0
      %1321 = vmatprep.subr.bf16.mxu0 0
      %1322 = vmatpush1.bf16.msra.mxu0 0
      %1323 = vmatprep.subr.bf16.mxu0 0
      %1324 = vmatpush1.bf16.msra.mxu0 0
      %1325 = vmatprep.subr.bf16.mxu0 0
      %1326 = vmatpush1.bf16.msra.mxu0 0
      %1327 = vmatprep.subr.bf16.mxu0 0
      %1328 = vmatpush1.bf16.msra.mxu0 0
      %1329 = vmatprep.mubr.bf16.mxu0 0
      %1330 = vmatmul.mubr.bf16.gmra.mrb[0].mxu0 %v983
      %v1331 = vpop.f32.mrb[0].mxu0
      %v1332 = vadd.f32 %v1235, %v1331
      %v1333 = vpop.f32.mrb[0].mxu0
      %v1334 = vpop.f32.mrb[0].mxu0
      %v1335 = vadd.f32 %v1238, %v1334
      %v1336 = vpop.f32.mrb[0].mxu0
      %1337 = vmatprep.mubr.bf16.mxu0 0
      %1338 = vmatmul.mubr.bf16.gmra.mrb[0].mxu0 %v986
      %v1339 = vpop.f32.mrb[0].mxu0
      %v1340 = vadd.f32 %v1243, %v1339
      %v1341 = vpop.f32.mrb[0].mxu0
      %v1342 = vpop.f32.mrb[0].mxu0
      %v1343 = vadd.f32 %v1246, %v1342
      %v1344 = vpop.f32.mrb[0].mxu0
      %1345 = vmatprep.mubr.bf16.mxu0 0
      %1346 = vmatmul.mubr.bf16.gmra.mrb[0].mxu0 %v989
      %v1347 = vpop.f32.mrb[0].mxu0
      %v1348 = vadd.f32 %v1251, %v1347
      %v1349 = vpop.f32.mrb[0].mxu0
      %v1350 = vpop.f32.mrb[0].mxu0
      %v1351 = vadd.f32 %v1254, %v1350
      %v1352 = vpop.f32.mrb[0].mxu0
      %1353 = vmatprep.mubr.bf16.mxu0 0
      %1354 = vmatmul.mubr.bf16.gmra.mrb[0].mxu0 %v992
      %v1355 = vpop.f32.mrb[0].mxu0
      %v1356 = vadd.f32 %v1259, %v1355
      %v1357 = vpop.f32.mrb[0].mxu0
      %v1358 = vpop.f32.mrb[0].mxu0
      %v1359 = vadd.f32 %v1262, %v1358
      %v1360 = vpop.f32.mrb[0].mxu0
      %1361 = vmatprep.mubr.bf16.mxu0 0
      %1362 = vmatmul.mubr.bf16.gmra.mrb[0].mxu0 %v995
      %v1363 = vpop.f32.mrb[0].mxu0
      %v1364 = vadd.f32 %v1267, %v1363
      %v1365 = vpop.f32.mrb[0].mxu0
      %v1366 = vpop.f32.mrb[0].mxu0
      %v1367 = vadd.f32 %v1270, %v1366
      %v1368 = vpop.f32.mrb[0].mxu0
      %1369 = vmatprep.mubr.bf16.mxu0 0
      %1370 = vmatmul.mubr.bf16.gmra.mrb[0].mxu0 %v998
      %v1371 = vpop.f32.mrb[0].mxu0
      %v1372 = vadd.f32 %v1275, %v1371
      %v1373 = vpop.f32.mrb[0].mxu0
      %v1374 = vpop.f32.mrb[0].mxu0
      %v1375 = vadd.f32 %v1278, %v1374
      %v1376 = vpop.f32.mrb[0].mxu0
      %1377 = vmatprep.mubr.bf16.mxu0 0
      %1378 = vmatmul.mubr.bf16.gmra.mrb[0].mxu0 %v1001
      %v1379 = vpop.f32.mrb[0].mxu0
      %v1380 = vadd.f32 %v1283, %v1379
      %v1381 = vpop.f32.mrb[0].mxu0
      %v1382 = vpop.f32.mrb[0].mxu0
      %v1383 = vadd.f32 %v1286, %v1382
      %v1384 = vpop.f32.mrb[0].mxu0
      %1385 = vmatprep.mubr.bf16.mxu0 0
      %1386 = vmatmul.mubr.bf16.gmra.mrb[0].mxu0 %v1004
      %v1387 = vpop.f32.mrb[0].mxu0
      %v1388 = vadd.f32 %v1291, %v1387
      %v1389 = vpop.f32.mrb[0].mxu0
      %v1390 = vpop.f32.mrb[0].mxu0
      %v1391 = vadd.f32 %v1294, %v1390
      %v1392 = vpop.f32.mrb[0].mxu0
      %1393 = vdwg.mxu0
      %v1394 = vld [vmem:[%s2] sm:$0x1]
      %v1396 = vlaneseq
      %v1397 = vshrl.u32 %v1396, 7
      %v1398 = vsub.s32 0, %v1397
      %v1399 = vrot.slane %v1394, %v1398
      %v1401 = vmul.f32 %v1332, %v1399
      %v1402 = vmul.f32 %v1335, %v1399
      %v1403 = vmul.f32 %v1340, %v1399
      %v1404 = vmul.f32 %v1343, %v1399
      %v1405 = vmul.f32 %v1348, %v1399
      %v1406 = vmul.f32 %v1351, %v1399
      %v1407 = vmul.f32 %v1356, %v1399
      %v1408 = vmul.f32 %v1359, %v1399
      %v1409 = vmul.f32 %v1364, %v1399
      %v1410 = vmul.f32 %v1367, %v1399
      %v1411 = vmul.f32 %v1372, %v1399
      %v1412 = vmul.f32 %v1375, %v1399
      %v1413 = vmul.f32 %v1380, %v1399
      %v1414 = vmul.f32 %v1383, %v1399
      %v1415 = vmul.f32 %v1388, %v1399
      %v1416 = vmul.f32 %v1391, %v1399
      %v1417 = vld [vmem:[%s3] sm:$0x1]
      %v1419 = vlaneseq
      %v1420 = vshrl.u32 %v1419, 7
      %v1421 = vsub.s32 0, %v1420
      %v1422 = vrot.slane %v1417, %v1421
      %v1424 = vadd.f32 %v1401, %v1422
      %v1425 = vadd.f32 %v1402, %v1422
      %v1426 = vadd.f32 %v1403, %v1422
      %v1427 = vadd.f32 %v1404, %v1422
      %v1428 = vadd.f32 %v1405, %v1422
      %v1429 = vadd.f32 %v1406, %v1422
      %v1430 = vadd.f32 %v1407, %v1422
      %v1431 = vadd.f32 %v1408, %v1422
      %v1432 = vadd.f32 %v1409, %v1422
      %v1433 = vadd.f32 %v1410, %v1422
      %v1434 = vadd.f32 %v1411, %v1422
      %v1435 = vadd.f32 %v1412, %v1422
      %v1436 = vadd.f32 %v1413, %v1422
      %v1437 = vadd.f32 %v1414, %v1422
      %v1438 = vadd.f32 %v1415, %v1422
      %v1439 = vadd.f32 %v1416, %v1422
      %v1440 = vmax.f32 %v1424, 0.0
      %v1441 = vmax.f32 %v1425, 0.0
      %v1442 = vmax.f32 %v1426, 0.0
      %v1443 = vmax.f32 %v1427, 0.0
      %v1444 = vmax.f32 %v1428, 0.0
      %v1445 = vmax.f32 %v1429, 0.0
      %v1446 = vmax.f32 %v1430, 0.0
      %v1447 = vmax.f32 %v1431, 0.0
      %v1448 = vmax.f32 %v1432, 0.0
      %v1449 = vmax.f32 %v1433, 0.0
      %v1450 = vmax.f32 %v1434, 0.0
      %v1451 = vmax.f32 %v1435, 0.0
      %v1452 = vmax.f32 %v1436, 0.0
      %v1453 = vmax.f32 %v1437, 0.0
      %v1454 = vmax.f32 %v1438, 0.0
      %v1455 = vmax.f32 %v1439, 0.0
      %vm1456 = vcmask 261120
      %1457 = vst.msk [vmem:[%s202] sm:$0xff] %vm1456, %v1440
      %1458 = vst.msk [vmem:[%s202 + $0x8] sm:$0xff] %vm1456, %v1441
      %1459 = vst.msk [vmem:[%s202 + $0x10] sm:$0xff] %vm1456, %v1442
      %1460 = vst.msk [vmem:[%s202 + $0x18] sm:$0xff] %vm1456, %v1443
      %1461 = vst.msk [vmem:[%s202 + $0x20] sm:$0xff] %vm1456, %v1444
      %1462 = vst.msk [vmem:[%s202 + $0x28] sm:$0xff] %vm1456, %v1445
      %1463 = vst.msk [vmem:[%s202 + $0x30] sm:$0xff] %vm1456, %v1446
      %1464 = vst.msk [vmem:[%s202 + $0x38] sm:$0xff] %vm1456, %v1447
      %1465 = vst.msk [vmem:[%s202 + $0x40] sm:$0xff] %vm1456, %v1448
      %1466 = vst.msk [vmem:[%s202 + $0x48] sm:$0xff] %vm1456, %v1449
      %1467 = vst.msk [vmem:[%s202 + $0x50] sm:$0xff] %vm1456, %v1450
      %1468 = vst.msk [vmem:[%s202 + $0x58] sm:$0xff] %vm1456, %v1451
      %1469 = vst.msk [vmem:[%s202 + $0x60] sm:$0xff] %vm1456, %v1452
      %1470 = vst.msk [vmem:[%s202 + $0x68] sm:$0xff] %vm1456, %v1453
      %1471 = vst.msk [vmem:[%s202 + $0x70] sm:$0xff] %vm1456, %v1454
      %1472 = vst.msk [vmem:[%s202 + $0x78] sm:$0xff] %vm1456, %v1455
      %s1473 = smul.u32 16, %s15
      %p1474 = scmp.lt.s32.totalorder %s1473, 47
      %s1475 = scalar_select %p1474, %s1473, 47
      %s1476 = smul.addr %s1475, 8
      %s1477 = scalar_lea.vmem %s4, %s1476
      // Predicated region
      $region37: #{domain_basic_block_forward.2} parent=35 // pred_check
        %p1478 = pneg %p122
      $region38: #{domain_basic_block_forward.2} parent=35 // pred_check_branch
        %1480 = sbr.rel (%p1478) target = $region40
      $region39: #{domain_basic_block_forward.2} parent=35 // pred_region
        %s1481 = smul.u32 16, %s15
      $region40: #{domain_basic_block_forward.2} parent=35 // pred_fallthru
        _
    $region36: #{domain_basic_block_forward.2} parent=5 // pred_fallthru
      _
    %p1482 = scmp.le.s32.totalorder 2, %s10
    // Predicated region
    $region41: #{domain_basic_block_forward.2} parent=5 // pred_check
      %p1483 = pneg %p1482
    $region42: #{domain_basic_block_forward.2} parent=5 // pred_check_branch
      %1485 = sbr.rel (%p1483) target = $region44
    $region43: #{domain_basic_block_forward.2} parent=5 // pred_region
      %s1486 = ssub.s32 %s10, 2
      // Predicated region
      $region45: #{domain_basic_block_forward.2} parent=43 // pred_check
        %p1487 = pneg %p128
      $region46: #{domain_basic_block_forward.2} parent=43 // pred_check_branch
        %1489 = sbr.rel (%p1487) target = $region48
      $region47: #{domain_basic_block_forward.2} parent=43 // pred_region
        %s1490 = smul.u32 16, %s16
        %p1491 = scmp.lt.s32.totalorder %s1490, 47
        %s1492 = scalar_select %p1491, %s1490, 47
        %s1493 = smul.addr %s1492, 8
        %s1494 = scalar_lea.vmem %s4, %s1493
      $region48: #{domain_basic_block_forward.2} parent=43 // pred_fallthru
        _
    $region44: #{domain_basic_block_forward.2} parent=5 // pred_fallthru
      _
  $region6: #{domain_basic_block_forward.2} parent=0 // loop_footer
    %s14 = sadd.s32 1, %s10
  $region7: #{domain_basic_block_forward.2} parent=0 // loop_footer_branch
    %9 = sbr.rel target = $region3
  $region8: #{domain_basic_block_forward.2} parent=0 // loop_exit
    _

</llo_original>
